<compile_context>
chip_gen: v5e
topology: v5e:2x2
jax: 0.10.0
libtpu: 0.0.40
codegen_flags: <defaults>
</compile_context>

<pallas_src>
import functools

import jax
import jax.numpy as jnp
from jax.experimental import pallas as pl
from jax.experimental.pallas import tpu as pltpu


def _head_kernel(x_ref, w1_ref, b1_ref, w2_ref, b2_ref, o_ref, acc_ref, *, inv_hw):
    """x_ref: [Bt, HWt, C]; acc_ref: [Bt, C] f32; o_ref: [Bt, 128] (lane-padded)."""
    k = pl.program_id(1)

    @pl.when(k == 0)
    def _():
        acc_ref[...] = jnp.zeros_like(acc_ref)

    # Partial spatial sum for this HW chunk (accumulated in f32).  The kernel
    # is HBM-stream bound, so this cross-sublane reduce is hidden under DMA.
    # TODO(synk): if a v7x bundle dump ever shows XLU on the critical path,
    # switch to a [Bt, 8, C] VALU-only partial accumulator reduced at k==last.
    acc_ref[...] += jnp.sum(x_ref[...].astype(jnp.float32), axis=1)

    @pl.when(k == pl.num_programs(1) - 1)
    def _():
        # AdaptiveAvgPool2d((1,1)) + Flatten  ==  mean over HW  ==  sum * (1/HW).
        pooled = acc_ref[...] * inv_hw                              # [Bt, C] f32
        # fc1 (1280 -> 128) + ReLU.  Dropout(0.5) is identity at inference.
        h = jnp.dot(pooled.astype(w1_ref.dtype), w1_ref[...],
                    preferred_element_type=jnp.float32)
        h = jnp.maximum(h + b1_ref[...].astype(jnp.float32), 0.0)   # [Bt, 128]
        # fc2 (128 -> 2), lane-padded to 128 so the store is a full-lane vst.
        out = jnp.dot(h.astype(w2_ref.dtype), w2_ref[...],
                      preferred_element_type=jnp.float32) + b2_ref[...].astype(jnp.float32)
        o_ref[...] = out.astype(o_ref.dtype)


def _sublane_multiple(dtype):
    """Sublane packing multiple: 8 for 32-bit, 16 for bf16/f16, 32 for 8-bit."""
    bits = jnp.dtype(dtype).itemsize * 8
    return max(8, 256 // bits)


def _legal_divisors(n, multiple):
    """Divisors of n that are a multiple of `multiple` or equal to n itself."""
    return [d for d in range(1, n + 1) if n % d == 0 and (d % multiple == 0 or d == n)]


def _tpu_budget():
    """Returns (feature-block byte target, vmem_limit_bytes, prefer_batch_split)."""
    try:
        kind = jax.devices()[0].device_kind.lower()
    except Exception:
        kind = ""
    if ("v7" in kind) or ("7x" in kind):
        # v7x: 64 MiB VMEM/TC -> cap feature block ~10 MiB, scoped limit 48 MiB,
        # and prefer >=2 batch tiles so both TensorCores get work.
        return 10 << 20, 48 << 20, True
    # v5e / v6e: 128 MiB VMEM, single TC.  Raise the scoped limit past v5e's
    # 16 MiB default so two buffers of a ~14 MiB block + weights fit.
    return 14 << 20, 96 << 20, False


def _choose_tiles(b_opts, hw_opts, B, C, itemsize, target_bytes, prefer_batch_split):
    """Largest feature block <= target; on v7x prefer n_b >= 2 (grow HW tile
    instead of the batch tile); ties broken towards a larger HW tile."""
    can_split = any(d < B for d in b_opts)
    best = None
    for bt in b_opts:
        for ht in hw_opts:
            blk = bt * ht * C * itemsize
            fits = blk <= target_bytes
            split_ok = (not prefer_batch_split) or (not can_split) or bt < B
            key = (fits, split_ok, blk if fits else -blk, ht)
            if best is None or key > best[0]:
                best = (key, bt, ht)
    return best[1], best[2]


def fake_image_model_head(feats_bhwc, w1, b1, w2, b2, *, b_tile=None, hw_tile=None):
    """Head of FakeImageModel (eval mode).

    feats_bhwc: channels-last backbone features, [B, HW, C] (C = 1280);
      f32 or bf16 (bf16 recommended -- halves HBM traffic, accumulation stays f32).
    w1: [1280, 128], b1: [128], w2: [128, 2], b2: [2]  ("x @ W" orientation).
    Returns logits [B, 2] in f32.
    """
    B, HW, C = feats_bhwc.shape
    n_out = w2.shape[1]
    feat_isz = jnp.dtype(feats_bhwc.dtype).itemsize

    b1 = b1.reshape(1, -1)
    b2 = b2.reshape(1, -1)

    # Pad fc2 / output to 128 lanes (lane-dense store in the kernel); slice after.
    n_pad = 128
    w2p = jnp.zeros((w2.shape[0], n_pad), w2.dtype).at[:, :n_out].set(w2)
    b2p = jnp.zeros((1, n_pad), b2.dtype).at[:, :n_out].set(b2)

    # --- generation-aware tiling ------------------------------------------------
    block_target, vmem_limit, prefer_split = _tpu_budget()
    sub = _sublane_multiple(feats_bhwc.dtype)
    b_opts = _legal_divisors(B, 8)        # output block 2nd-minor dim: mult of 8 or == B
    hw_opts = _legal_divisors(HW, sub)    # feature block 2nd-minor dim: dtype-aware
    if b_tile is not None and b_tile in b_opts:
        b_opts = [b_tile]
    if hw_tile is not None and hw_tile in hw_opts:
        hw_opts = [hw_tile]
    b_tile, hw_tile = _choose_tiles(b_opts, hw_opts, B, C, feat_isz,
                                    block_target, prefer_split)
    n_b, n_hw = B // b_tile, HW // hw_tile

    kernel = functools.partial(_head_kernel, inv_hw=1.0 / float(HW))

    # Advisory cost hint: real logit count (n_out), not the lane-padded 128.
    flops = B * HW * C + 2 * B * C * 128 + 2 * B * 128 * n_out
    bytes_accessed = (feats_bhwc.size * feat_isz
                      + w1.size * jnp.dtype(w1.dtype).itemsize
                      + w2p.size * jnp.dtype(w2.dtype).itemsize
                      + (b1.size + b2p.size) * 4
                      + B * n_pad * 4)

    def build(single_buffer_consts):
        const_kw = {}
        if single_buffer_consts and hasattr(pl, "Buffered"):
            # Constant-index operands don't need double-buffering; frees VMEM
            # for the feature block (matters most inside v7x's 64 MiB budget).
            const_kw = dict(pipeline_mode=pl.Buffered(1))
        return pl.pallas_call(
            kernel,
            grid=(n_b, n_hw),
            out_shape=jax.ShapeDtypeStruct((B, n_pad), jnp.float32),
            in_specs=[
                # features: tiled over (batch, HW-chunk); C whole on the lane axis.
                pl.BlockSpec((b_tile, hw_tile, C), lambda i, k: (i, k, 0)),
                # weights/biases: constant block index -> fetched once, VMEM-resident.
                pl.BlockSpec((C, 128), lambda i, k: (0, 0), **const_kw),      # fc1 W
                pl.BlockSpec((1, 128), lambda i, k: (0, 0), **const_kw),      # fc1 b
                pl.BlockSpec((128, n_pad), lambda i, k: (0, 0), **const_kw),  # fc2 W (padded)
                pl.BlockSpec((1, n_pad), lambda i, k: (0, 0), **const_kw),    # fc2 b (padded)
            ],
            # Output block constant along the HW axis (accumulator pattern,
            # written only at the last HW step).
            out_specs=pl.BlockSpec((b_tile, n_pad), lambda i, k: (i, 0)),
            scratch_shapes=[pltpu.VMEM((b_tile, C), jnp.float32)],  # pooled-sum acc
            compiler_params=pltpu.CompilerParams(
                dimension_semantics=("parallel", "arbitrary"),
                vmem_limit_bytes=int(vmem_limit)),
            cost_estimate=pl.CostEstimate(
                flops=int(flops), transcendentals=0,
                bytes_accessed=int(bytes_accessed)),
        )

    try:
        out_padded = build(single_buffer_consts=True)(feats_bhwc, w1, b1, w2p, b2p)
        out_padded = jax.block_until_ready(out_padded)
    except Exception:
        # Fallback for JAX versions without BlockSpec pipeline_mode support.
        out_padded = build(single_buffer_consts=False)(feats_bhwc, w1, b1, w2p, b2p)

    return out_padded[:, :n_out]


if __name__ == "__main__":
    key = jax.random.PRNGKey(0)
    kf, k1, k2, k3, k4 = jax.random.split(key, 5)

    # Channels-last backbone features [B, HW, C]; MobileNetV2 features -> C = 1280.
    # Small demo: batch 2, 8x8 spatial map.
    B, H, W, C = 2, 8, 8, 1280
    HW = H * W
    feats = jax.random.normal(kf, (B, HW, C), dtype=jnp.float32)

    # Deterministic PyTorch-style Linear init: U(-1/sqrt(fan_in), +1/sqrt(fan_in)).
    lim1 = 1.0 / (1280.0 ** 0.5)
    w1 = jax.random.uniform(k1, (1280, 128), jnp.float32, -lim1, lim1)
    b1 = jax.random.uniform(k2, (128,), jnp.float32, -lim1, lim1)
    lim2 = 1.0 / (128.0 ** 0.5)
    w2 = jax.random.uniform(k3, (128, 2), jnp.float32, -lim2, lim2)
    b2 = jax.random.uniform(k4, (2,), jnp.float32, -lim2, lim2)

    # ---- f32 path (hw_tile=8 exercises the multi-chunk pooling accumulator) ----
    out_f32 = jax.block_until_ready(
        fake_image_model_head(feats, w1, b1, w2, b2, hw_tile=8))
    assert out_f32.shape == (B, 2), out_f32.shape
    pooled_ref = jnp.mean(feats, axis=1)                            # [B, 1280]
    ref_f32 = jnp.maximum(pooled_ref @ w1 + b1, 0.0) @ w2 + b2      # [B, 2]
    assert jnp.allclose(out_f32, ref_f32, atol=1e-4, rtol=1e-4), (out_f32, ref_f32)

    # ---- bf16 path (recommended: halves HBM traffic; accumulation stays f32) ---
    feats_bf = feats.astype(jnp.bfloat16)
    w1_bf, w2_bf = w1.astype(jnp.bfloat16), w2.astype(jnp.bfloat16)
    out_bf = jax.block_until_ready(
        fake_image_model_head(feats_bf, w1_bf, b1, w2_bf, b2, hw_tile=32))
    assert out_bf.shape == (B, 2), out_bf.shape
    # Reference emulating the kernel's dtype handling (bf16 operands, f32 accum).
    pooled_bf = jnp.mean(feats_bf.astype(jnp.float32), axis=1)
    h_bf = jnp.maximum(
        jnp.dot(pooled_bf.astype(jnp.bfloat16), w1_bf,
                preferred_element_type=jnp.float32) + b1, 0.0)
    ref_bf = jnp.dot(h_bf.astype(jnp.bfloat16), w2_bf,
                     preferred_element_type=jnp.float32) + b2
    assert jnp.allclose(out_bf, ref_bf, atol=2e-2, rtol=2e-2), (out_bf, ref_bf)

    print("KERNEL_OK")
</pallas_src>

<mosaic_0001>
module attributes {stable_mosaic.version = 11 : i64} {
  func.func @_head_kernel(%arg0: i32, %arg1: i32, %arg2: memref<2x8x1280xf32, #tpu.memory_space<vmem>>, %arg3: memref<1280x128xf32, #tpu.memory_space<vmem>>, %arg4: memref<1x128xf32, #tpu.memory_space<vmem>>, %arg5: memref<128x128xf32, #tpu.memory_space<vmem>>, %arg6: memref<1x128xf32, #tpu.memory_space<vmem>>, %arg7: memref<2x128xf32, #tpu.memory_space<vmem>>, %arg8: memref<2x1280xf32, #tpu.memory_space<vmem>>) attributes {dimension_semantics = [#tpu.dimension_semantics<parallel>, #tpu.dimension_semantics<arbitrary>], iteration_bounds = array<i64: 1, 8>, scalar_prefetch = 0 : i64, scratch_operands = 1 : i64, tpu.core_type = #tpu.core_type<tc>, window_params = [{transform_indices = @transform_0, window_bounds = array<i64: 2, 8, 1280>}, {pipeline_mode = #tpu.pipeline_mode<synchronous>, transform_indices = @transform_1, window_bounds = array<i64: 1280, 128>}, {pipeline_mode = #tpu.pipeline_mode<synchronous>, transform_indices = @transform_2, window_bounds = array<i64: 1, 128>}, {pipeline_mode = #tpu.pipeline_mode<synchronous>, transform_indices = @transform_3, window_bounds = array<i64: 128, 128>}, {pipeline_mode = #tpu.pipeline_mode<synchronous>, transform_indices = @transform_4, window_bounds = array<i64: 1, 128>}, {transform_indices = @transform_5, window_bounds = array<i64: 2, 128>}]} {
    %c0_i32 = arith.constant 0 : i32
    %0 = arith.cmpi eq, %arg1, %c0_i32 : i32
    %1 = arith.extui %0 : i1 to i32
    %c0_i32_0 = arith.constant 0 : i32
    %2 = arith.cmpi ne, %1, %c0_i32_0 : i32
    scf.if %2 {
      %cst_8 = arith.constant 0.000000e+00 : f32
      %11 = vector.broadcast %cst_8 : f32 to vector<2x1280xf32>
      %c0_9 = arith.constant 0 : index
      %c0_10 = arith.constant 0 : index
      %12 = vector.load %arg8[%c0_9, %c0_10] : memref<2x1280xf32, #tpu.memory_space<vmem>>, vector<2x1280xf32>
      tpu.vector_store %arg8[%c0_9, %c0_10], %11 {strides = array<i32>} : memref<2x1280xf32, #tpu.memory_space<vmem>>, vector<2x1280xf32>,
    } else {
    }
    %c0 = arith.constant 0 : index
    %c0_1 = arith.constant 0 : index
    %3 = vector.load %arg8[%c0, %c0_1] : memref<2x1280xf32, #tpu.memory_space<vmem>>, vector<2x1280xf32>
    %c0_2 = arith.constant 0 : index
    %c0_3 = arith.constant 0 : index
    %c0_4 = arith.constant 0 : index
    %4 = vector.load %arg2[%c0_2, %c0_3, %c0_4] : memref<2x8x1280xf32, #tpu.memory_space<vmem>>, vector<2x8x1280xf32>
    %cst = arith.constant dense<0.000000e+00> : vector<2x1280xf32>
    %5 = vector.multi_reduction <add>, %4, %cst [1] : vector<2x8x1280xf32> to vector<2x1280xf32>
    %6 = arith.addf %3, %5 : vector<2x1280xf32>
    %c0_5 = arith.constant 0 : index
    %c0_6 = arith.constant 0 : index
    %7 = vector.load %arg8[%c0_5, %c0_6] : memref<2x1280xf32, #tpu.memory_space<vmem>>, vector<2x1280xf32>
    tpu.vector_store %arg8[%c0_5, %c0_6], %6 {strides = array<i32>} : memref<2x1280xf32, #tpu.memory_space<vmem>>, vector<2x1280xf32>,
    %c7_i32 = arith.constant 7 : i32
    %8 = arith.cmpi eq, %arg1, %c7_i32 : i32
    %9 = arith.extui %8 : i1 to i32
    %c0_i32_7 = arith.constant 0 : i32
    %10 = arith.cmpi ne, %9, %c0_i32_7 : i32
    scf.if %10 {
      %c0_8 = arith.constant 0 : index
      %c0_9 = arith.constant 0 : index
      %11 = vector.load %arg8[%c0_8, %c0_9] : memref<2x1280xf32, #tpu.memory_space<vmem>>, vector<2x1280xf32>
      %cst_10 = arith.constant 1.562500e-02 : f32
      %12 = vector.broadcast %cst_10 : f32 to vector<2x1280xf32>
      %13 = arith.mulf %11, %12 : vector<2x1280xf32>
      %c0_11 = arith.constant 0 : index
      %c0_12 = arith.constant 0 : index
      %14 = vector.load %arg3[%c0_11, %c0_12] : memref<1280x128xf32, #tpu.memory_space<vmem>>, vector<1280x128xf32>
      %cst_13 = arith.constant dense<0.000000e+00> : vector<2x128xf32>
      %15 = tpu.matmul %13, %14, %cst_13 {dimension_numbers = #tpu.dot_dimension_numbers<[1], [0], [0], [1], [0, 0, 1, 1], [], []>} : vector<2x1280xf32>, vector<1280x128xf32>, vector<2x128xf32> -> vector<2x128xf32>
      %c0_14 = arith.constant 0 : index
      %c0_15 = arith.constant 0 : index
      %16 = vector.load %arg4[%c0_14, %c0_15] : memref<1x128xf32, #tpu.memory_space<vmem>>, vector<1x128xf32>
      %17 = vector.broadcast %16 : vector<1x128xf32> to vector<2x128xf32>
      %18 = arith.addf %15, %17 : vector<2x128xf32>
      %cst_16 = arith.constant 0.000000e+00 : f32
      %19 = vector.broadcast %cst_16 : f32 to vector<2x128xf32>
      %20 = arith.maximumf %18, %19 : vector<2x128xf32>
      %c0_17 = arith.constant 0 : index
      %c0_18 = arith.constant 0 : index
      %21 = vector.load %arg5[%c0_17, %c0_18] : memref<128x128xf32, #tpu.memory_space<vmem>>, vector<128x128xf32>
      %cst_19 = arith.constant dense<0.000000e+00> : vector<2x128xf32>
      %22 = tpu.matmul %20, %21, %cst_19 {dimension_numbers = #tpu.dot_dimension_numbers<[1], [0], [0], [1], [0, 0, 1, 1], [], []>} : vector<2x128xf32>, vector<128x128xf32>, vector<2x128xf32> -> vector<2x128xf32>
      %c0_20 = arith.constant 0 : index
      %c0_21 = arith.constant 0 : index
      %23 = vector.load %arg6[%c0_20, %c0_21] : memref<1x128xf32, #tpu.memory_space<vmem>>, vector<1x128xf32>
      %24 = vector.broadcast %23 : vector<1x128xf32> to vector<2x128xf32>
      %25 = arith.addf %22, %24 : vector<2x128xf32>
      %c0_22 = arith.constant 0 : index
      %c0_23 = arith.constant 0 : index
      %26 = vector.load %arg7[%c0_22, %c0_23] : memref<2x128xf32, #tpu.memory_space<vmem>>, vector<2x128xf32>
      tpu.vector_store %arg7[%c0_22, %c0_23], %25 {strides = array<i32>} : memref<2x128xf32, #tpu.memory_space<vmem>>, vector<2x128xf32>,
    } else {
    }
    return
  }
  func.func @transform_0(%arg0: i32, %arg1: i32) -> (i32, i32, i32) {
    %c0_i32 = arith.constant 0 : i32
    %c0_i32_0 = arith.constant 0 : i32
    return %arg0, %arg1, %c0_i32 : i32, i32, i32
  }
  func.func @transform_1(%arg0: i32, %arg1: i32) -> (i32, i32) {
    %c0_i32 = arith.constant 0 : i32
    %c0_i32_0 = arith.constant 0 : i32
    %c0_i32_1 = arith.constant 0 : i32
    return %c0_i32, %c0_i32_0 : i32, i32
  }
  func.func @transform_2(%arg0: i32, %arg1: i32) -> (i32, i32) {
    %c0_i32 = arith.constant 0 : i32
    %c0_i32_0 = arith.constant 0 : i32
    %c0_i32_1 = arith.constant 0 : i32
    return %c0_i32, %c0_i32_0 : i32, i32
  }
  func.func @transform_3(%arg0: i32, %arg1: i32) -> (i32, i32) {
    %c0_i32 = arith.constant 0 : i32
    %c0_i32_0 = arith.constant 0 : i32
    %c0_i32_1 = arith.constant 0 : i32
    return %c0_i32, %c0_i32_0 : i32, i32
  }
  func.func @transform_4(%arg0: i32, %arg1: i32) -> (i32, i32) {
    %c0_i32 = arith.constant 0 : i32
    %c0_i32_0 = arith.constant 0 : i32
    %c0_i32_1 = arith.constant 0 : i32
    return %c0_i32, %c0_i32_0 : i32, i32
  }
  func.func @transform_5(%arg0: i32, %arg1: i32) -> (i32, i32) {
    %c0_i32 = arith.constant 0 : i32
    %c0_i32_0 = arith.constant 0 : i32
    return %arg0, %c0_i32 : i32, i32
  }
}

module attributes {stable_mosaic.version = 11 : i64} {
  func.func @_head_kernel(%arg0: i32, %arg1: i32, %arg2: memref<2x8x1280xf32, #tpu.memory_space<vmem>>, %arg3: memref<1280x128xf32, #tpu.memory_space<vmem>>, %arg4: memref<1x128xf32, #tpu.memory_space<vmem>>, %arg5: memref<128x128xf32, #tpu.memory_space<vmem>>, %arg6: memref<1x128xf32, #tpu.memory_space<vmem>>, %arg7: memref<2x128xf32, #tpu.memory_space<vmem>>, %arg8: memref<2x1280xf32, #tpu.memory_space<vmem>>) attributes {dimension_semantics = [#tpu.dimension_semantics<parallel>, #tpu.dimension_semantics<arbitrary>], iteration_bounds = array<i64: 1, 8>, scalar_prefetch = 0 : i64, scratch_operands = 1 : i64, tpu.core_type = #tpu.core_type<tc>, window_params = [{transform_indices = @transform_0, window_bounds = array<i64: 2, 8, 1280>}, {pipeline_mode = #tpu.pipeline_mode<synchronous>, transform_indices = @transform_1, window_bounds = array<i64: 1280, 128>}, {pipeline_mode = #tpu.pipeline_mode<synchronous>, transform_indices = @transform_2, window_bounds = array<i64: 1, 128>}, {pipeline_mode = #tpu.pipeline_mode<synchronous>, transform_indices = @transform_3, window_bounds = array<i64: 128, 128>}, {pipeline_mode = #tpu.pipeline_mode<synchronous>, transform_indices = @transform_4, window_bounds = array<i64: 1, 128>}, {transform_indices = @transform_5, window_bounds = array<i64: 2, 128>}]} {
    %c0_i32 = arith.constant 0 : i32
    %0 = arith.cmpi eq, %arg1, %c0_i32 : i32
    %1 = arith.extui %0 : i1 to i32
    %c0_i32_0 = arith.constant 0 : i32
    %2 = arith.cmpi ne, %1, %c0_i32_0 : i32
    scf.if %2 {
      %cst_8 = arith.constant 0.000000e+00 : f32
      %11 = vector.broadcast %cst_8 : f32 to vector<2x1280xf32>
      %c0_9 = arith.constant 0 : index
      %c0_10 = arith.constant 0 : index
      %12 = vector.load %arg8[%c0_9, %c0_10] : memref<2x1280xf32, #tpu.memory_space<vmem>>, vector<2x1280xf32>
      tpu.vector_store %arg8[%c0_9, %c0_10], %11 {strides = array<i32>} : memref<2x1280xf32, #tpu.memory_space<vmem>>, vector<2x1280xf32>,
    } else {
    }
    %c0 = arith.constant 0 : index
    %c0_1 = arith.constant 0 : index
    %3 = vector.load %arg8[%c0, %c0_1] : memref<2x1280xf32, #tpu.memory_space<vmem>>, vector<2x1280xf32>
    %c0_2 = arith.constant 0 : index
    %c0_3 = arith.constant 0 : index
    %c0_4 = arith.constant 0 : index
    %4 = vector.load %arg2[%c0_2, %c0_3, %c0_4] : memref<2x8x1280xf32, #tpu.memory_space<vmem>>, vector<2x8x1280xf32>
    %cst = arith.constant dense<0.000000e+00> : vector<2x1280xf32>
    %5 = vector.multi_reduction <add>, %4, %cst [1] : vector<2x8x1280xf32> to vector<2x1280xf32>
    %6 = arith.addf %3, %5 : vector<2x1280xf32>
    %c0_5 = arith.constant 0 : index
    %c0_6 = arith.constant 0 : index
    %7 = vector.load %arg8[%c0_5, %c0_6] : memref<2x1280xf32, #tpu.memory_space<vmem>>, vector<2x1280xf32>
    tpu.vector_store %arg8[%c0_5, %c0_6], %6 {strides = array<i32>} : memref<2x1280xf32, #tpu.memory_space<vmem>>, vector<2x1280xf32>,
    %c7_i32 = arith.constant 7 : i32
    %8 = arith.cmpi eq, %arg1, %c7_i32 : i32
    %9 = arith.extui %8 : i1 to i32
    %c0_i32_7 = arith.constant 0 : i32
    %10 = arith.cmpi ne, %9, %c0_i32_7 : i32
    scf.if %10 {
      %c0_8 = arith.constant 0 : index
      %c0_9 = arith.constant 0 : index
      %11 = vector.load %arg8[%c0_8, %c0_9] : memref<2x1280xf32, #tpu.memory_space<vmem>>, vector<2x1280xf32>
      %cst_10 = arith.constant 1.562500e-02 : f32
      %12 = vector.broadcast %cst_10 : f32 to vector<2x1280xf32>
      %13 = arith.mulf %11, %12 : vector<2x1280xf32>
      %c0_11 = arith.constant 0 : index
      %c0_12 = arith.constant 0 : index
      %14 = vector.load %arg3[%c0_11, %c0_12] : memref<1280x128xf32, #tpu.memory_space<vmem>>, vector<1280x128xf32>
      %cst_13 = arith.constant dense<0.000000e+00> : vector<2x128xf32>
      %15 = tpu.matmul %13, %14, %cst_13 {dimension_numbers = #tpu.dot_dimension_numbers<[1], [0], [0], [1], [0, 0, 1, 1], [], []>} : vector<2x1280xf32>, vector<1280x128xf32>, vector<2x128xf32> -> vector<2x128xf32>
      %c0_14 = arith.constant 0 : index
      %c0_15 = arith.constant 0 : index
      %16 = vector.load %arg4[%c0_14, %c0_15] : memref<1x128xf32, #tpu.memory_space<vmem>>, vector<1x128xf32>
      %17 = vector.broadcast %16 : vector<1x128xf32> to vector<2x128xf32>
      %18 = arith.addf %15, %17 : vector<2x128xf32>
      %cst_16 = arith.constant 0.000000e+00 : f32
      %19 = vector.broadcast %cst_16 : f32 to vector<2x128xf32>
      %20 = arith.maximumf %18, %19 : vector<2x128xf32>
      %c0_17 = arith.constant 0 : index
      %c0_18 = arith.constant 0 : index
      %21 = vector.load %arg5[%c0_17, %c0_18] : memref<128x128xf32, #tpu.memory_space<vmem>>, vector<128x128xf32>
      %cst_19 = arith.constant dense<0.000000e+00> : vector<2x128xf32>
      %22 = tpu.matmul %20, %21, %cst_19 {dimension_numbers = #tpu.dot_dimension_numbers<[1], [0], [0], [1], [0, 0, 1, 1], [], []>} : vector<2x128xf32>, vector<128x128xf32>, vector<2x128xf32> -> vector<2x128xf32>
      %c0_20 = arith.constant 0 : index
      %c0_21 = arith.constant 0 : index
      %23 = vector.load %arg6[%c0_20, %c0_21] : memref<1x128xf32, #tpu.memory_space<vmem>>, vector<1x128xf32>
      %24 = vector.broadcast %23 : vector<1x128xf32> to vector<2x128xf32>
      %25 = arith.addf %22, %24 : vector<2x128xf32>
      %c0_22 = arith.constant 0 : index
      %c0_23 = arith.constant 0 : index
      %26 = vector.load %arg7[%c0_22, %c0_23] : memref<2x128xf32, #tpu.memory_space<vmem>>, vector<2x128xf32>
      tpu.vector_store %arg7[%c0_22, %c0_23], %25 {strides = array<i32>} : memref<2x128xf32, #tpu.memory_space<vmem>>, vector<2x128xf32>,
    } else {
    }
    return
  }
  func.func @transform_0(%arg0: i32, %arg1: i32) -> (i32, i32, i32) {
    %c0_i32 = arith.constant 0 : i32
    %c0_i32_0 = arith.constant 0 : i32
    return %arg0, %arg1, %c0_i32 : i32, i32, i32
  }
  func.func @transform_1(%arg0: i32, %arg1: i32) -> (i32, i32) {
    %c0_i32 = arith.constant 0 : i32
    %c0_i32_0 = arith.constant 0 : i32
    %c0_i32_1 = arith.constant 0 : i32
    return %c0_i32, %c0_i32_0 : i32, i32
  }
  func.func @transform_2(%arg0: i32, %arg1: i32) -> (i32, i32) {
    %c0_i32 = arith.constant 0 : i32
    %c0_i32_0 = arith.constant 0 : i32
    %c0_i32_1 = arith.constant 0 : i32
    return %c0_i32, %c0_i32_0 : i32, i32
  }
  func.func @transform_3(%arg0: i32, %arg1: i32) -> (i32, i32) {
    %c0_i32 = arith.constant 0 : i32
    %c0_i32_0 = arith.constant 0 : i32
    %c0_i32_1 = arith.constant 0 : i32
    return %c0_i32, %c0_i32_0 : i32, i32
  }
  func.func @transform_4(%arg0: i32, %arg1: i32) -> (i32, i32) {
    %c0_i32 = arith.constant 0 : i32
    %c0_i32_0 = arith.constant 0 : i32
    %c0_i32_1 = arith.constant 0 : i32
    return %c0_i32, %c0_i32_0 : i32, i32
  }
  func.func @transform_5(%arg0: i32, %arg1: i32) -> (i32, i32) {
    %c0_i32 = arith.constant 0 : i32
    %c0_i32_0 = arith.constant 0 : i32
    return %arg0, %c0_i32 : i32, i32
  }
}

</mosaic_0001>

<llo_original>
// kernel: tpu_custom_call.1
$region0: #{tpu_custom_call.1}
  #allocation0 [shape = 'u32[]', space=smem, size = 0x4, offset = 0x4, fixed_abs, tag = 'smem constant byte address 0x4 - core index']
  #allocation1 [shape = 'u32[72,128]{1,0:T(1,128)}', space=vmem, size = 0x9000, scoped, tag = 'internal scratch']
  #allocation2 [shape = 'f32[2,1280]{1,0:T(2,128)}', space=vmem, size = 0x2800, scoped, tag = 'scratch operand']
  %s0 = inlined_call_operand.hbm [shape: f32[2,64,1280], index: 0, kind: input, shape index: {}]
  %s1 = inlined_call_operand.hbm [shape: f32[1280,128], index: 1, kind: input, shape index: {}]
  %s2 = inlined_call_operand.vmem [shape: f32[1,128], index: 2, kind: input, shape index: {}]
  %s3 = inlined_call_operand.hbm [shape: f32[128,128], index: 3, kind: input, shape index: {}]
  %s4 = inlined_call_operand.vmem [shape: f32[1,128], index: 4, kind: input, shape index: {}]
  %s5 = inlined_call_operand.hbm [shape: f32[2,128], index: 5, kind: output, shape index: {}]
  %s6 = sld [smem:[#allocation0]]
  $region73: #{tpu_custom_call.1} parent=0
    _
  %s8 = ssub.s32 1, %s6
  %s9 = scalar_select 0, %s8, %s6
  $region1: #{tpu_custom_call.1} parent=0
    #allocation3 [shape = 'u8[163840]{0}', space=vmem, size = 0x28000, scoped, tag = 'input window, operand 0']
    #allocation4 [shape = 's32[2]{0}', space=sflag, size = 0x8, scoped, tag = 'scoped memory for tpu_custom_call.1']
    #allocation5 [shape = 's32[2]{0}', space=sflag, size = 0x8, scoped, tag = 'scoped memory for tpu_custom_call.1']
    #allocation6 [shape = 'u8[655360]{0}', space=vmem, size = 0xa0000, scoped, tag = 'input window, operand 1, single buffered']
    #allocation7 [shape = 's32[1]{0}', space=sflag, size = 0x4, scoped, tag = 'scoped memory for tpu_custom_call.1']
    #allocation8 [shape = 'u8[65536]{0}', space=vmem, size = 0x10000, scoped, tag = 'input window, operand 3, single buffered']
    #allocation9 [shape = 'u8[1024]{0}', space=vmem, size = 0x400, scoped, tag = 'output window, operand 0, single buffered']
    %10 = vsyncpa [#allocation4], 0
    %s11 = scalar_lea.sflag [#allocation4], 1
    %12 = vsyncpa %s11, 0
    %13 = vsyncpa [#allocation7], 0
    %14 = vsyncpa [#allocation5], 0
    loop: start=0, step=1, limit=10
    $region2: #{tpu_custom_call.1} parent=1 // loop_pre_header
      _
    $region3: #{tpu_custom_call.1} parent=1 // loop_header
      %s16 = sphi 0, %s20
      %p17 = scmp.ge.s32.totalorder %s16, 10
      %s23 = sphi 0, %s35
      %s24 = sphi 0, %s31
      %s25 = sphi 0, %s23
      %s26 = sphi 0, %s24
      %s27 = sphi 0, %s25
      %s28 = sphi 0, %s26
      %s40 = sphi 0, %s42
      %s43 = sphi 0, %s40
      %s44 = sphi 0, %s43
      %s60 = sphi 0, %s44
      %s64 = sphi 0, %s64
      %s66 = sphi 0, %s64
      %s67 = sphi 0, %s66
      %s81 = sphi 0, %s67
      %s85 = sphi 0, %s85
      %s87 = sphi 0, %s85
      %s88 = sphi 0, %s87
      %s102 = sphi 0, %s88
      %s106 = sphi 0, %s106
      %s108 = sphi 0, %s106
      %s109 = sphi 0, %s108
      %s123 = sphi 0, %s109
      %s127 = sphi 0, %s127
      %s129 = sphi 0, %s127
      %s130 = sphi 0, %s129
      %s144 = sphi 0, %s130
      %s150 = sphi 0, %s152
      %s153 = sphi 0, %s150
      %s154 = sphi 0, %s153
      %s170 = sphi 0, %s154
    $region4: #{tpu_custom_call.1} parent=1 // loop_header_branch
      %19 = sbr.rel (%p17) target = $region8
    $region5: #{tpu_custom_call.1} parent=1 // loop_body
      %s21 = ssub.s32 %s16, 1
      %s22 = ssub.s32 %s16, 2
      %s29 = sadd.s32 1, %s24
      %p30 = scmp.ge.s32.totalorder %s29, 8
      %s31 = scalar_select %p30, 0, %s29
      %s32 = sadd.s32 1, %s23
      %s33 = scalar_select %p30, %s32, %s23
      %p34 = scmp.ge.s32.totalorder %s33, 1
      %s35 = scalar_select %p34, 0, %s33
      %s36 = ssub.s32 %s23, %s35
      %s37 = ssub.s32 %s24, %s31
      %s38 = sor.u32 %s36, %s37
      %p39 = scmp.eq.s32.totalorder %s38, 0
      %s41 = sadd.s32 %s40, 1
      %s42 = scalar_select %p39, %s40, %s41
      %p45 = pneg %p39
      %p46 = scmp.eq.s32.totalorder %s16, 7
      %p47 = por %p45, %p46
      %p48 = scmp.ne.s32.totalorder %s40, %s43
      %p49 = scmp.eq.s32.totalorder %s16, 0
      %p50 = por %p48, %p49
      %p51 = scmp.ne.s32.totalorder %s40, %s43
      %p52 = scmp.eq.s32.totalorder %s21, 7
      %p53 = por %p51, %p52
      %p54 = scmp.ne.s32.totalorder %s43, %s44
      %p55 = scmp.eq.s32.totalorder %s21, 0
      %p56 = por %p54, %p55
      %p57 = scmp.ne.s32.totalorder %s43, %s44
      %p58 = scmp.eq.s32.totalorder %s22, 7
      %p59 = por %p57, %p58
      %p61 = scmp.ne.s32.totalorder %s44, %s60
      %p62 = scmp.eq.s32.totalorder %s22, 0
      %p63 = por %p61, %p62
      %s65 = sadd.s32 %s64, 1
      %p68 = scmp.eq.s32.totalorder %s16, 7
      %p69 = scmp.ne.s32.totalorder %s64, %s66
      %p70 = scmp.eq.s32.totalorder %s16, 0
      %p71 = por %p69, %p70
      %p72 = scmp.ne.s32.totalorder %s64, %s66
      %p73 = scmp.eq.s32.totalorder %s21, 7
      %p74 = por %p72, %p73
      %p75 = scmp.ne.s32.totalorder %s66, %s67
      %p76 = scmp.eq.s32.totalorder %s21, 0
      %p77 = por %p75, %p76
      %p78 = scmp.ne.s32.totalorder %s66, %s67
      %p79 = scmp.eq.s32.totalorder %s22, 7
      %p80 = por %p78, %p79
      %p82 = scmp.ne.s32.totalorder %s67, %s81
      %p83 = scmp.eq.s32.totalorder %s22, 0
      %p84 = por %p82, %p83
      %s86 = sadd.s32 %s85, 1
      %p89 = scmp.eq.s32.totalorder %s16, 7
      %p90 = scmp.ne.s32.totalorder %s85, %s87
      %p91 = scmp.eq.s32.totalorder %s16, 0
      %p92 = por %p90, %p91
      %p93 = scmp.ne.s32.totalorder %s85, %s87
      %p94 = scmp.eq.s32.totalorder %s21, 7
      %p95 = por %p93, %p94
      %p96 = scmp.ne.s32.totalorder %s87, %s88
      %p97 = scmp.eq.s32.totalorder %s21, 0
      %p98 = por %p96, %p97
      %p99 = scmp.ne.s32.totalorder %s87, %s88
      %p100 = scmp.eq.s32.totalorder %s22, 7
      %p101 = por %p99, %p100
      %p103 = scmp.ne.s32.totalorder %s88, %s102
      %p104 = scmp.eq.s32.totalorder %s22, 0
      %p105 = por %p103, %p104
      %s107 = sadd.s32 %s106, 1
      %p110 = scmp.eq.s32.totalorder %s16, 7
      %p111 = scmp.ne.s32.totalorder %s106, %s108
      %p112 = scmp.eq.s32.totalorder %s16, 0
      %p113 = por %p111, %p112
      %p114 = scmp.ne.s32.totalorder %s106, %s108
      %p115 = scmp.eq.s32.totalorder %s21, 7
      %p116 = por %p114, %p115
      %p117 = scmp.ne.s32.totalorder %s108, %s109
      %p118 = scmp.eq.s32.totalorder %s21, 0
      %p119 = por %p117, %p118
      %p120 = scmp.ne.s32.totalorder %s108, %s109
      %p121 = scmp.eq.s32.totalorder %s22, 7
      %p122 = por %p120, %p121
      %p124 = scmp.ne.s32.totalorder %s109, %s123
      %p125 = scmp.eq.s32.totalorder %s22, 0
      %p126 = por %p124, %p125
      %s128 = sadd.s32 %s127, 1
      %p131 = scmp.eq.s32.totalorder %s16, 7
      %p132 = scmp.ne.s32.totalorder %s127, %s129
      %p133 = scmp.eq.s32.totalorder %s16, 0
      %p134 = por %p132, %p133
      %p135 = scmp.ne.s32.totalorder %s127, %s129
      %p136 = scmp.eq.s32.totalorder %s21, 7
      %p137 = por %p135, %p136
      %p138 = scmp.ne.s32.totalorder %s129, %s130
      %p139 = scmp.eq.s32.totalorder %s21, 0
      %p140 = por %p138, %p139
      %p141 = scmp.ne.s32.totalorder %s129, %s130
      %p142 = scmp.eq.s32.totalorder %s22, 7
      %p143 = por %p141, %p142
      %p145 = scmp.ne.s32.totalorder %s130, %s144
      %p146 = scmp.eq.s32.totalorder %s22, 0
      %p147 = por %p145, %p146
      %s148 = ssub.s32 %s23, %s35
      %p149 = scmp.eq.s32.totalorder %s148, 0
      %s151 = sadd.s32 %s150, 1
      %s152 = scalar_select %p149, %s150, %s151
      %p155 = pneg %p149
      %p156 = scmp.eq.s32.totalorder %s16, 7
      %p157 = por %p155, %p156
      %p158 = scmp.ne.s32.totalorder %s150, %s153
      %p159 = scmp.eq.s32.totalorder %s16, 0
      %p160 = por %p158, %p159
      %p161 = scmp.ne.s32.totalorder %s150, %s153
      %p162 = scmp.eq.s32.totalorder %s21, 7
      %p163 = por %p161, %p162
      %p164 = scmp.ne.s32.totalorder %s153, %s154
      %p165 = scmp.eq.s32.totalorder %s21, 0
      %p166 = por %p164, %p165
      %p167 = scmp.ne.s32.totalorder %s153, %s154
      %p168 = scmp.eq.s32.totalorder %s22, 7
      %p169 = por %p167, %p168
      %p171 = scmp.ne.s32.totalorder %s154, %s170
      %p172 = scmp.eq.s32.totalorder %s22, 0
      %p173 = por %p171, %p172
      %p174 = scmp.le.s32.totalorder 1, %s16
      %p175 = scmp.lt.s32.totalorder %s16, 9
      %p176 = pnand %p174, %p175
      %p177 = pneg %p176
      // Predicated region
      $region9: #{tpu_custom_call.1} parent=5 // pred_check
        _
      $region10: #{tpu_custom_call.1} parent=5 // pred_check_branch
        %179 = sbr.rel (%p176) target = $region12
      $region11: #{tpu_custom_call.1} parent=5 // pred_region
        %s180 = ssub.s32 %s16, 1
        // Predicated region
        $region13: #{tpu_custom_call.1} parent=11 // pred_check
          %p181 = pneg %p77
        $region14: #{tpu_custom_call.1} parent=11 // pred_check_branch
          %183 = sbr.rel (%p181) target = $region16
        $region15: #{tpu_custom_call.1} parent=11 // pred_region
          %185 = vsyncadd [#allocation7], 0
          %s186 = sshll.u32 %s1, 4
          %s187 = int_to_ptr.hbm [resolvable:$true] %s186
          %s188 = sshll.u32 [#allocation6], 4
          %s189 = int_to_ptr.vmem [resolvable:$true] %s188
          %194 = dma.hbm_to_vmem [thread:$0]  %s187, 20480, %s189, [#allocation7], 128, 128, 8
        $region16: #{tpu_custom_call.1} parent=11 // pred_fallthru
          _
        // Predicated region
        $region17: #{tpu_custom_call.1} parent=11 // pred_check
          %p195 = pneg %p98
        $region18: #{tpu_custom_call.1} parent=11 // pred_check_branch
          %197 = sbr.rel (%p195) target = $region20
        $region19: #{tpu_custom_call.1} parent=11 // pred_region
          _
        $region20: #{tpu_custom_call.1} parent=11 // pred_fallthru
          _
        // Predicated region
        $region21: #{tpu_custom_call.1} parent=11 // pred_check
          %p198 = pneg %p119
        $region22: #{tpu_custom_call.1} parent=11 // pred_check_branch
          %200 = sbr.rel (%p198) target = $region24
        $region23: #{tpu_custom_call.1} parent=11 // pred_region
          %202 = vsyncadd [#allocation7], 0
          %s203 = sshll.u32 %s3, 4
          %s204 = int_to_ptr.hbm [resolvable:$true] %s203
          %s205 = sshll.u32 [#allocation8], 4
          %s206 = int_to_ptr.vmem [resolvable:$true] %s205
          %211 = dma.hbm_to_vmem [thread:$0]  %s204, 2048, %s206, [#allocation7], 128, 128, 8
        $region24: #{tpu_custom_call.1} parent=11 // pred_fallthru
          _
        // Predicated region
        $region25: #{tpu_custom_call.1} parent=11 // pred_check
          %p212 = pneg %p140
        $region26: #{tpu_custom_call.1} parent=11 // pred_check_branch
          %214 = sbr.rel (%p212) target = $region28
        $region27: #{tpu_custom_call.1} parent=11 // pred_region
          _
        $region28: #{tpu_custom_call.1} parent=11 // pred_fallthru
          _
      $region12: #{tpu_custom_call.1} parent=5 // pred_fallthru
        _
      %p215 = scmp.lt.s32.totalorder %s16, 8
      // Predicated region
      $region29: #{tpu_custom_call.1} parent=5 // pred_check
        %p216 = pneg %p215
      $region30: #{tpu_custom_call.1} parent=5 // pred_check_branch
        %218 = sbr.rel (%p216) target = $region32
      $region31: #{tpu_custom_call.1} parent=5 // pred_region
        // Predicated region
        $region33: #{tpu_custom_call.1} parent=31 // pred_check
          %p219 = pneg %p50
        $region34: #{tpu_custom_call.1} parent=31 // pred_check_branch
          %221 = sbr.rel (%p219) target = $region36
        $region35: #{tpu_custom_call.1} parent=31 // pred_region
          %s222 = sand.u32 %s40, 1
          %s223 = scalar_lea.sflag [#allocation4], %s222
          %s224 = sand.u32 %s40, 1
          %s225 = smul.addr %s224, 160
          %s226 = scalar_lea.vmem [#allocation3], %s225
          %s227 = smul.u32 2, %s23
          %229 = vsyncadd %s223, 0
          %s230 = smul.addr %s24, 10
          %s231 = smul.addr %s227, 80
          %s232 = sadd.s32 %s230, %s231
          %s233 = smul.addr %s232, 8
          %s234 = scalar_lea.hbm %s0, %s233
          %s235 = sshll.u32 %s234, 4
          %s236 = int_to_ptr.hbm [resolvable:$true] %s235
          %s237 = sshll.u32 %s226, 4
          %s238 = int_to_ptr.vmem [resolvable:$true] %s237
          %243 = dma.hbm_to_vmem [thread:$0]  %s236, 2560, %s238, %s223, 10240, 1280, 80
        $region36: #{tpu_custom_call.1} parent=31 // pred_fallthru
          _
      $region32: #{tpu_custom_call.1} parent=5 // pred_fallthru
        _
      %p244 = scmp.le.s32.totalorder 1, %s16
      %p245 = scmp.lt.s32.totalorder %s16, 9
      %p246 = pnand %p244, %p245
      %p247 = pneg %p246
      // Predicated region
      $region37: #{tpu_custom_call.1} parent=5 // pred_check
        _
      $region38: #{tpu_custom_call.1} parent=5 // pred_check_branch
        %249 = sbr.rel (%p246) target = $region40
      $region39: #{tpu_custom_call.1} parent=5 // pred_region
        %s250 = ssub.s32 %s16, 1
        %s251 = sand.u32 %s43, 1
        %s252 = scalar_lea.sflag [#allocation4], %s251
        %s253 = sand.u32 %s43, 1
        %s254 = smul.addr %s253, 160
        %s255 = scalar_lea.vmem [#allocation3], %s254
        // Predicated region
        $region41: #{tpu_custom_call.1} parent=39 // pred_check
          %p256 = pneg %p56
        $region42: #{tpu_custom_call.1} parent=39 // pred_check_branch
          %258 = sbr.rel (%p256) target = $region44
        $region43: #{tpu_custom_call.1} parent=39 // pred_region
          %260 = dma.done %s252, 2560
        $region44: #{tpu_custom_call.1} parent=39 // pred_fallthru
          _
        // Predicated region
        $region45: #{tpu_custom_call.1} parent=39 // pred_check
          %p261 = pneg %p77
        $region46: #{tpu_custom_call.1} parent=39 // pred_check_branch
          %263 = sbr.rel (%p261) target = $region48
        $region47: #{tpu_custom_call.1} parent=39 // pred_region
          %265 = dma.done [#allocation7], 20480
        $region48: #{tpu_custom_call.1} parent=39 // pred_fallthru
          _
        // Predicated region
        $region49: #{tpu_custom_call.1} parent=39 // pred_check
          %p266 = pneg %p119
        $region50: #{tpu_custom_call.1} parent=39 // pred_check_branch
          %268 = sbr.rel (%p266) target = $region52
        $region51: #{tpu_custom_call.1} parent=39 // pred_region
          %270 = dma.done [#allocation7], 2048
        $region52: #{tpu_custom_call.1} parent=39 // pred_fallthru
          _
        %s271 = sand.u32 %s43, 1
        %s272 = scalar_lea.sflag [#allocation4], %s271
        %s273 = sand.u32 %s43, 1
        %s274 = smul.addr %s273, 160
        %s275 = scalar_lea.vmem [#allocation3], %s274
        %p276 = pneg %p56
        %p277 = pneg %p53
        %p278 = pneg %p77
        %p279 = pneg %p74
        %p280 = pneg %p98
        %p281 = pneg %p95
        %p282 = pneg %p119
        %p283 = pneg %p116
        %p284 = pneg %p140
        %p285 = pneg %p137
        %p286 = pneg %p166
        %p287 = pneg %p163
        %s288 = smul.u32 2, %s25
        %p289 = scmp.eq.s32.totalorder %s26, 0
        // Predicated region
        $region53: #{tpu_custom_call.1} parent=39 // pred_check
          %p290 = pneg %p289
        $region54: #{tpu_custom_call.1} parent=39 // pred_check_branch
          %292 = sbr.rel (%p290) target = $region56
        $region55: #{tpu_custom_call.1} parent=39 // pred_region
          %293 = vst [vmem:[#allocation2] sm:$0xff] 0.0
          %294 = vst [vmem:[#allocation2 + $0x8] sm:$0xff] 0.0
          %295 = vst [vmem:[#allocation2 + $0x10] sm:$0xf] 0.0
        $region56: #{tpu_custom_call.1} parent=39 // pred_fallthru
          _
        %v296 = vld [vmem:[#allocation2] sm:$0xff]
        %v297 = vld [vmem:[#allocation2 + $0x8] sm:$0xff]
        %v298 = vld [vmem:[#allocation2 + $0x10] sm:$0xf]
        %v299 = vld [vmem:[%s255] sm:$0xff]
        %v300 = vld [vmem:[%s255 + $0x8] sm:$0xff]
        %v301 = vld [vmem:[%s255 + $0x10] sm:$0xff]
        %v302 = vld [vmem:[%s255 + $0x18] sm:$0xff]
        %v303 = vld [vmem:[%s255 + $0x20] sm:$0xff]
        %v304 = vld [vmem:[%s255 + $0x28] sm:$0xff]
        %v305 = vld [vmem:[%s255 + $0x30] sm:$0xff]
        %v306 = vld [vmem:[%s255 + $0x38] sm:$0xff]
        %v307 = vld [vmem:[%s255 + $0x40] sm:$0xff]
        %v308 = vld [vmem:[%s255 + $0x48] sm:$0xff]
        %v309 = vld [vmem:[%s255 + $0x50] sm:$0xff]
        %v310 = vld [vmem:[%s255 + $0x58] sm:$0xff]
        %v311 = vld [vmem:[%s255 + $0x60] sm:$0xff]
        %v312 = vld [vmem:[%s255 + $0x68] sm:$0xff]
        %v313 = vld [vmem:[%s255 + $0x70] sm:$0xff]
        %v314 = vld [vmem:[%s255 + $0x78] sm:$0xff]
        %v315 = vld [vmem:[%s255 + $0x80] sm:$0xff]
        %v316 = vld [vmem:[%s255 + $0x88] sm:$0xff]
        %v317 = vld [vmem:[%s255 + $0x90] sm:$0xff]
        %v318 = vld [vmem:[%s255 + $0x98] sm:$0xff]
        %v319 = vrot.slane %v299, 4
        %v320 = vadd.f32 %v299, %v319
        %v321 = vrot.slane %v320, 2
        %v322 = vadd.f32 %v320, %v321
        %v323 = vrot.slane %v322, 1
        %v324 = vadd.f32 %v322, %v323
        %v325 = vrot.slane %v300, 4
        %v326 = vadd.f32 %v300, %v325
        %v327 = vrot.slane %v326, 2
        %v328 = vadd.f32 %v326, %v327
        %v329 = vrot.slane %v328, 1
        %v330 = vadd.f32 %v328, %v329
        %v331 = vrot.slane %v301, 4
        %v332 = vadd.f32 %v301, %v331
        %v333 = vrot.slane %v332, 2
        %v334 = vadd.f32 %v332, %v333
        %v335 = vrot.slane %v334, 1
        %v336 = vadd.f32 %v334, %v335
        %v337 = vrot.slane %v302, 4
        %v338 = vadd.f32 %v302, %v337
        %v339 = vrot.slane %v338, 2
        %v340 = vadd.f32 %v338, %v339
        %v341 = vrot.slane %v340, 1
        %v342 = vadd.f32 %v340, %v341
        %v343 = vrot.slane %v303, 4
        %v344 = vadd.f32 %v303, %v343
        %v345 = vrot.slane %v344, 2
        %v346 = vadd.f32 %v344, %v345
        %v347 = vrot.slane %v346, 1
        %v348 = vadd.f32 %v346, %v347
        %v349 = vrot.slane %v304, 4
        %v350 = vadd.f32 %v304, %v349
        %v351 = vrot.slane %v350, 2
        %v352 = vadd.f32 %v350, %v351
        %v353 = vrot.slane %v352, 1
        %v354 = vadd.f32 %v352, %v353
        %v355 = vrot.slane %v305, 4
        %v356 = vadd.f32 %v305, %v355
        %v357 = vrot.slane %v356, 2
        %v358 = vadd.f32 %v356, %v357
        %v359 = vrot.slane %v358, 1
        %v360 = vadd.f32 %v358, %v359
        %v361 = vrot.slane %v306, 4
        %v362 = vadd.f32 %v306, %v361
        %v363 = vrot.slane %v362, 2
        %v364 = vadd.f32 %v362, %v363
        %v365 = vrot.slane %v364, 1
        %v366 = vadd.f32 %v364, %v365
        %v367 = vrot.slane %v307, 4
        %v368 = vadd.f32 %v307, %v367
        %v369 = vrot.slane %v368, 2
        %v370 = vadd.f32 %v368, %v369
        %v371 = vrot.slane %v370, 1
        %v372 = vadd.f32 %v370, %v371
        %v373 = vrot.slane %v308, 4
        %v374 = vadd.f32 %v308, %v373
        %v375 = vrot.slane %v374, 2
        %v376 = vadd.f32 %v374, %v375
        %v377 = vrot.slane %v376, 1
        %v378 = vadd.f32 %v376, %v377
        %v379 = vrot.slane %v309, 4
        %v380 = vadd.f32 %v309, %v379
        %v381 = vrot.slane %v380, 2
        %v382 = vadd.f32 %v380, %v381
        %v383 = vrot.slane %v382, 1
        %v384 = vadd.f32 %v382, %v383
        %v385 = vrot.slane %v310, 4
        %v386 = vadd.f32 %v310, %v385
        %v387 = vrot.slane %v386, 2
        %v388 = vadd.f32 %v386, %v387
        %v389 = vrot.slane %v388, 1
        %v390 = vadd.f32 %v388, %v389
        %v391 = vrot.slane %v311, 4
        %v392 = vadd.f32 %v311, %v391
        %v393 = vrot.slane %v392, 2
        %v394 = vadd.f32 %v392, %v393
        %v395 = vrot.slane %v394, 1
        %v396 = vadd.f32 %v394, %v395
        %v397 = vrot.slane %v312, 4
        %v398 = vadd.f32 %v312, %v397
        %v399 = vrot.slane %v398, 2
        %v400 = vadd.f32 %v398, %v399
        %v401 = vrot.slane %v400, 1
        %v402 = vadd.f32 %v400, %v401
        %v403 = vrot.slane %v313, 4
        %v404 = vadd.f32 %v313, %v403
        %v405 = vrot.slane %v404, 2
        %v406 = vadd.f32 %v404, %v405
        %v407 = vrot.slane %v406, 1
        %v408 = vadd.f32 %v406, %v407
        %v409 = vrot.slane %v314, 4
        %v410 = vadd.f32 %v314, %v409
        %v411 = vrot.slane %v410, 2
        %v412 = vadd.f32 %v410, %v411
        %v413 = vrot.slane %v412, 1
        %v414 = vadd.f32 %v412, %v413
        %v415 = vrot.slane %v315, 4
        %v416 = vadd.f32 %v315, %v415
        %v417 = vrot.slane %v416, 2
        %v418 = vadd.f32 %v416, %v417
        %v419 = vrot.slane %v418, 1
        %v420 = vadd.f32 %v418, %v419
        %v421 = vrot.slane %v316, 4
        %v422 = vadd.f32 %v316, %v421
        %v423 = vrot.slane %v422, 2
        %v424 = vadd.f32 %v422, %v423
        %v425 = vrot.slane %v424, 1
        %v426 = vadd.f32 %v424, %v425
        %v427 = vrot.slane %v317, 4
        %v428 = vadd.f32 %v317, %v427
        %v429 = vrot.slane %v428, 2
        %v430 = vadd.f32 %v428, %v429
        %v431 = vrot.slane %v430, 1
        %v432 = vadd.f32 %v430, %v431
        %v433 = vrot.slane %v318, 4
        %v434 = vadd.f32 %v318, %v433
        %v435 = vrot.slane %v434, 2
        %v436 = vadd.f32 %v434, %v435
        %v437 = vrot.slane %v436, 1
        %v438 = vadd.f32 %v436, %v437
        %v459 = vrot.slane %v330, 6
        %v460 = vrot.slane %v336, 4
        %v461 = vrot.slane %v342, 2
        %v462 = vrot.slane %v354, 6
        %v463 = vrot.slane %v360, 4
        %v464 = vrot.slane %v366, 2
        %v465 = vrot.slane %v378, 6
        %v466 = vrot.slane %v390, 6
        %v467 = vrot.slane %v396, 4
        %v468 = vrot.slane %v402, 2
        %v469 = vrot.slane %v414, 6
        %v470 = vrot.slane %v420, 4
        %v471 = vrot.slane %v426, 2
        %v472 = vrot.slane %v438, 6
        %vm473 = vcmask 1041408
        %v474 = vsel %vm473, %v324, %v459
        %vm475 = vcmask 1045508
        %v476 = vsel %vm475, %v460, %v461
        %vm477 = vcmask 1043456
        %v478 = vsel %vm477, %v474, %v476
        %v479 = vsel %vm473, %v348, %v462
        %v480 = vsel %vm475, %v463, %v464
        %v481 = vsel %vm477, %v479, %v480
        %v482 = vsel %vm473, %v372, %v465
        %v483 = vsel %vm473, %v384, %v466
        %v484 = vsel %vm475, %v467, %v468
        %v485 = vsel %vm477, %v483, %v484
        %v486 = vsel %vm473, %v408, %v469
        %v487 = vsel %vm475, %v470, %v471
        %v488 = vsel %vm477, %v486, %v487
        %v489 = vsel %vm473, %v432, %v472
        %vm490 = vcmask 1044484
        %v491 = vsel %vm490, %v478, %v478
        %vm492 = vcmask 1046534
        %v493 = vsel %vm492, %v478, %v491
        %v494 = vrot.slane %v485, 7
        %vm495 = vcmask 1041409
        %v496 = vsel %vm495, %v494, %v493
        %vm497 = vcmask 1043459
        %v498 = vsel %vm497, %v494, %v496
        %vm499 = vcmask 1045509
        %v500 = vsel %vm499, %v494, %v498
        %vm501 = vcmask 1047559
        %v502 = vsel %vm501, %v494, %v500
        %v503 = vsel %vm490, %v481, %v481
        %v504 = vsel %vm492, %v481, %v503
        %v505 = vrot.slane %v488, 7
        %v506 = vsel %vm495, %v505, %v504
        %v507 = vsel %vm497, %v505, %v506
        %v508 = vsel %vm499, %v505, %v507
        %v509 = vsel %vm501, %v505, %v508
        %v510 = vsel %vm490, %v482, %v482
        %v511 = vsel %vm492, %v482, %v510
        %v512 = vrot.slane %v489, 7
        %v513 = vsel %vm495, %v512, %v511
        %v514 = vsel %vm497, %v512, %v513
        %v515 = vsel %vm499, %v512, %v514
        %v516 = vsel %vm501, %v512, %v515
        %v520 = vadd.f32 %v296, %v502
        %v521 = vadd.f32 %v297, %v509
        %v522 = vadd.f32 %v298, %v516
        %523 = vst [vmem:[#allocation2] sm:$0xff] %v520
        %524 = vst [vmem:[#allocation2 + $0x8] sm:$0xff] %v521
        %525 = vst [vmem:[#allocation2 + $0x10] sm:$0xf] %v522
        %p526 = scmp.eq.s32.totalorder %s26, 7
        // Predicated region
        $region57: #{tpu_custom_call.1} parent=39 // pred_check
          %p527 = pneg %p526
        $region58: #{tpu_custom_call.1} parent=39 // pred_check_branch
          %529 = sbr.rel (%p527) target = $region60
        $region59: #{tpu_custom_call.1} parent=39 // pred_region
          %v530 = vld [vmem:[#allocation2] sm:$0xff]
          %v531 = vld [vmem:[#allocation2 + $0x8] sm:$0xff]
          %v532 = vld [vmem:[#allocation2 + $0x10] sm:$0xf]
          %v533 = vmul.f32 %v530, 0.015625
          %v534 = vmul.f32 %v531, 0.015625
          %v535 = vmul.f32 %v532, 0.015625
          %v536 = vld [vmem:[#allocation6] sm:$0xff]
          %v537 = vld [vmem:[#allocation6 + $0x8] sm:$0xff]
          %v538 = vld [vmem:[#allocation6 + $0x10] sm:$0xff]
          %v539 = vld [vmem:[#allocation6 + $0x18] sm:$0xff]
          %v540 = vld [vmem:[#allocation6 + $0x20] sm:$0xff]
          %v541 = vld [vmem:[#allocation6 + $0x28] sm:$0xff]
          %v542 = vld [vmem:[#allocation6 + $0x30] sm:$0xff]
          %v543 = vld [vmem:[#allocation6 + $0x38] sm:$0xff]
          %v544 = vld [vmem:[#allocation6 + $0x40] sm:$0xff]
          %v545 = vld [vmem:[#allocation6 + $0x48] sm:$0xff]
          %v546 = vld [vmem:[#allocation6 + $0x50] sm:$0xff]
          %v547 = vld [vmem:[#allocation6 + $0x58] sm:$0xff]
          %v548 = vld [vmem:[#allocation6 + $0x60] sm:$0xff]
          %v549 = vld [vmem:[#allocation6 + $0x68] sm:$0xff]
          %v550 = vld [vmem:[#allocation6 + $0x70] sm:$0xff]
          %v551 = vld [vmem:[#allocation6 + $0x78] sm:$0xff]
          %v552 = vld [vmem:[#allocation6 + $0x80] sm:$0xff]
          %v553 = vld [vmem:[#allocation6 + $0x88] sm:$0xff]
          %v554 = vld [vmem:[#allocation6 + $0x90] sm:$0xff]
          %v555 = vld [vmem:[#allocation6 + $0x98] sm:$0xff]
          %v556 = vld [vmem:[#allocation6 + $0xa0] sm:$0xff]
          %v557 = vld [vmem:[#allocation6 + $0xa8] sm:$0xff]
          %v558 = vld [vmem:[#allocation6 + $0xb0] sm:$0xff]
          %v559 = vld [vmem:[#allocation6 + $0xb8] sm:$0xff]
          %v560 = vld [vmem:[#allocation6 + $0xc0] sm:$0xff]
          %v561 = vld [vmem:[#allocation6 + $0xc8] sm:$0xff]
          %v562 = vld [vmem:[#allocation6 + $0xd0] sm:$0xff]
          %v563 = vld [vmem:[#allocation6 + $0xd8] sm:$0xff]
          %v564 = vld [vmem:[#allocation6 + $0xe0] sm:$0xff]
          %v565 = vld [vmem:[#allocation6 + $0xe8] sm:$0xff]
          %v566 = vld [vmem:[#allocation6 + $0xf0] sm:$0xff]
          %v567 = vld [vmem:[#allocation6 + $0xf8] sm:$0xff]
          %v568 = vld [vmem:[#allocation6 + $0x100] sm:$0xff]
          %v569 = vld [vmem:[#allocation6 + $0x108] sm:$0xff]
          %v570 = vld [vmem:[#allocation6 + $0x110] sm:$0xff]
          %v571 = vld [vmem:[#allocation6 + $0x118] sm:$0xff]
          %v572 = vld [vmem:[#allocation6 + $0x120] sm:$0xff]
          %v573 = vld [vmem:[#allocation6 + $0x128] sm:$0xff]
          %v574 = vld [vmem:[#allocation6 + $0x130] sm:$0xff]
          %v575 = vld [vmem:[#allocation6 + $0x138] sm:$0xff]
          %v576 = vld [vmem:[#allocation6 + $0x140] sm:$0xff]
          %v577 = vld [vmem:[#allocation6 + $0x148] sm:$0xff]
          %v578 = vld [vmem:[#allocation6 + $0x150] sm:$0xff]
          %v579 = vld [vmem:[#allocation6 + $0x158] sm:$0xff]
          %v580 = vld [vmem:[#allocation6 + $0x160] sm:$0xff]
          %v581 = vld [vmem:[#allocation6 + $0x168] sm:$0xff]
          %v582 = vld [vmem:[#allocation6 + $0x170] sm:$0xff]
          %v583 = vld [vmem:[#allocation6 + $0x178] sm:$0xff]
          %v584 = vld [vmem:[#allocation6 + $0x180] sm:$0xff]
          %v585 = vld [vmem:[#allocation6 + $0x188] sm:$0xff]
          %v586 = vld [vmem:[#allocation6 + $0x190] sm:$0xff]
          %v587 = vld [vmem:[#allocation6 + $0x198] sm:$0xff]
          %v588 = vld [vmem:[#allocation6 + $0x1a0] sm:$0xff]
          %v589 = vld [vmem:[#allocation6 + $0x1a8] sm:$0xff]
          %v590 = vld [vmem:[#allocation6 + $0x1b0] sm:$0xff]
          %v591 = vld [vmem:[#allocation6 + $0x1b8] sm:$0xff]
          %v592 = vld [vmem:[#allocation6 + $0x1c0] sm:$0xff]
          %v593 = vld [vmem:[#allocation6 + $0x1c8] sm:$0xff]
          %v594 = vld [vmem:[#allocation6 + $0x1d0] sm:$0xff]
          %v595 = vld [vmem:[#allocation6 + $0x1d8] sm:$0xff]
          %v596 = vld [vmem:[#allocation6 + $0x1e0] sm:$0xff]
          %v597 = vld [vmem:[#allocation6 + $0x1e8] sm:$0xff]
          %v598 = vld [vmem:[#allocation6 + $0x1f0] sm:$0xff]
          %v599 = vld [vmem:[#allocation6 + $0x1f8] sm:$0xff]
          %v600 = vld [vmem:[#allocation6 + $0x200] sm:$0xff]
          %v601 = vld [vmem:[#allocation6 + $0x208] sm:$0xff]
          %v602 = vld [vmem:[#allocation6 + $0x210] sm:$0xff]
          %v603 = vld [vmem:[#allocation6 + $0x218] sm:$0xff]
          %v604 = vld [vmem:[#allocation6 + $0x220] sm:$0xff]
          %v605 = vld [vmem:[#allocation6 + $0x228] sm:$0xff]
          %v606 = vld [vmem:[#allocation6 + $0x230] sm:$0xff]
          %v607 = vld [vmem:[#allocation6 + $0x238] sm:$0xff]
          %v608 = vld [vmem:[#allocation6 + $0x240] sm:$0xff]
          %v609 = vld [vmem:[#allocation6 + $0x248] sm:$0xff]
          %v610 = vld [vmem:[#allocation6 + $0x250] sm:$0xff]
          %v611 = vld [vmem:[#allocation6 + $0x258] sm:$0xff]
          %v612 = vld [vmem:[#allocation6 + $0x260] sm:$0xff]
          %v613 = vld [vmem:[#allocation6 + $0x268] sm:$0xff]
          %v614 = vld [vmem:[#allocation6 + $0x270] sm:$0xff]
          %v615 = vld [vmem:[#allocation6 + $0x278] sm:$0xff]
          %v616 = vld [vmem:[#allocation6 + $0x280] sm:$0xff]
          %v617 = vld [vmem:[#allocation6 + $0x288] sm:$0xff]
          %v618 = vld [vmem:[#allocation6 + $0x290] sm:$0xff]
          %v619 = vld [vmem:[#allocation6 + $0x298] sm:$0xff]
          %v620 = vld [vmem:[#allocation6 + $0x2a0] sm:$0xff]
          %v621 = vld [vmem:[#allocation6 + $0x2a8] sm:$0xff]
          %v622 = vld [vmem:[#allocation6 + $0x2b0] sm:$0xff]
          %v623 = vld [vmem:[#allocation6 + $0x2b8] sm:$0xff]
          %v624 = vld [vmem:[#allocation6 + $0x2c0] sm:$0xff]
          %v625 = vld [vmem:[#allocation6 + $0x2c8] sm:$0xff]
          %v626 = vld [vmem:[#allocation6 + $0x2d0] sm:$0xff]
          %v627 = vld [vmem:[#allocation6 + $0x2d8] sm:$0xff]
          %v628 = vld [vmem:[#allocation6 + $0x2e0] sm:$0xff]
          %v629 = vld [vmem:[#allocation6 + $0x2e8] sm:$0xff]
          %v630 = vld [vmem:[#allocation6 + $0x2f0] sm:$0xff]
          %v631 = vld [vmem:[#allocation6 + $0x2f8] sm:$0xff]
          %v632 = vld [vmem:[#allocation6 + $0x300] sm:$0xff]
          %v633 = vld [vmem:[#allocation6 + $0x308] sm:$0xff]
          %v634 = vld [vmem:[#allocation6 + $0x310] sm:$0xff]
          %v635 = vld [vmem:[#allocation6 + $0x318] sm:$0xff]
          %v636 = vld [vmem:[#allocation6 + $0x320] sm:$0xff]
          %v637 = vld [vmem:[#allocation6 + $0x328] sm:$0xff]
          %v638 = vld [vmem:[#allocation6 + $0x330] sm:$0xff]
          %v639 = vld [vmem:[#allocation6 + $0x338] sm:$0xff]
          %v640 = vld [vmem:[#allocation6 + $0x340] sm:$0xff]
          %v641 = vld [vmem:[#allocation6 + $0x348] sm:$0xff]
          %v642 = vld [vmem:[#allocation6 + $0x350] sm:$0xff]
          %v643 = vld [vmem:[#allocation6 + $0x358] sm:$0xff]
          %v644 = vld [vmem:[#allocation6 + $0x360] sm:$0xff]
          %v645 = vld [vmem:[#allocation6 + $0x368] sm:$0xff]
          %v646 = vld [vmem:[#allocation6 + $0x370] sm:$0xff]
          %v647 = vld [vmem:[#allocation6 + $0x378] sm:$0xff]
          %v648 = vld [vmem:[#allocation6 + $0x380] sm:$0xff]
          %v649 = vld [vmem:[#allocation6 + $0x388] sm:$0xff]
          %v650 = vld [vmem:[#allocation6 + $0x390] sm:$0xff]
          %v651 = vld [vmem:[#allocation6 + $0x398] sm:$0xff]
          %v652 = vld [vmem:[#allocation6 + $0x3a0] sm:$0xff]
          %v653 = vld [vmem:[#allocation6 + $0x3a8] sm:$0xff]
          %v654 = vld [vmem:[#allocation6 + $0x3b0] sm:$0xff]
          %v655 = vld [vmem:[#allocation6 + $0x3b8] sm:$0xff]
          %v656 = vld [vmem:[#allocation6 + $0x3c0] sm:$0xff]
          %v657 = vld [vmem:[#allocation6 + $0x3c8] sm:$0xff]
          %v658 = vld [vmem:[#allocation6 + $0x3d0] sm:$0xff]
          %v659 = vld [vmem:[#allocation6 + $0x3d8] sm:$0xff]
          %v660 = vld [vmem:[#allocation6 + $0x3e0] sm:$0xff]
          %v661 = vld [vmem:[#allocation6 + $0x3e8] sm:$0xff]
          %v662 = vld [vmem:[#allocation6 + $0x3f0] sm:$0xff]
          %v663 = vld [vmem:[#allocation6 + $0x3f8] sm:$0xff]
          %v664 = vld [vmem:[#allocation6 + $0x400] sm:$0xff]
          %v665 = vld [vmem:[#allocation6 + $0x408] sm:$0xff]
          %v666 = vld [vmem:[#allocation6 + $0x410] sm:$0xff]
          %v667 = vld [vmem:[#allocation6 + $0x418] sm:$0xff]
          %v668 = vld [vmem:[#allocation6 + $0x420] sm:$0xff]
          %v669 = vld [vmem:[#allocation6 + $0x428] sm:$0xff]
          %v670 = vld [vmem:[#allocation6 + $0x430] sm:$0xff]
          %v671 = vld [vmem:[#allocation6 + $0x438] sm:$0xff]
          %v672 = vld [vmem:[#allocation6 + $0x440] sm:$0xff]
          %v673 = vld [vmem:[#allocation6 + $0x448] sm:$0xff]
          %v674 = vld [vmem:[#allocation6 + $0x450] sm:$0xff]
          %v675 = vld [vmem:[#allocation6 + $0x458] sm:$0xff]
          %v676 = vld [vmem:[#allocation6 + $0x460] sm:$0xff]
          %v677 = vld [vmem:[#allocation6 + $0x468] sm:$0xff]
          %v678 = vld [vmem:[#allocation6 + $0x470] sm:$0xff]
          %v679 = vld [vmem:[#allocation6 + $0x478] sm:$0xff]
          %v680 = vld [vmem:[#allocation6 + $0x480] sm:$0xff]
          %v681 = vld [vmem:[#allocation6 + $0x488] sm:$0xff]
          %v682 = vld [vmem:[#allocation6 + $0x490] sm:$0xff]
          %v683 = vld [vmem:[#allocation6 + $0x498] sm:$0xff]
          %v684 = vld [vmem:[#allocation6 + $0x4a0] sm:$0xff]
          %v685 = vld [vmem:[#allocation6 + $0x4a8] sm:$0xff]
          %v686 = vld [vmem:[#allocation6 + $0x4b0] sm:$0xff]
          %v687 = vld [vmem:[#allocation6 + $0x4b8] sm:$0xff]
          %v688 = vld [vmem:[#allocation6 + $0x4c0] sm:$0xff]
          %v689 = vld [vmem:[#allocation6 + $0x4c8] sm:$0xff]
          %v690 = vld [vmem:[#allocation6 + $0x4d0] sm:$0xff]
          %v691 = vld [vmem:[#allocation6 + $0x4d8] sm:$0xff]
          %v692 = vld [vmem:[#allocation6 + $0x4e0] sm:$0xff]
          %v693 = vld [vmem:[#allocation6 + $0x4e8] sm:$0xff]
          %v694 = vld [vmem:[#allocation6 + $0x4f0] sm:$0xff]
          %v695 = vld [vmem:[#allocation6 + $0x4f8] sm:$0xff]
          %v696 = vld [vmem:[%s2] sm:$0x1]
          %v698 = vperm.slane %v696, 0
          %703 = vst [vmem:[#allocation1] ss:$4 sm:$0xff] %v533
          %s704 = scalar_lea.vmem [#allocation1], 32
          %705 = vst [vmem:[%s704] ss:$4 sm:$0xff] %v534
          %v706 = vld.sshfl [vmem:[#allocation1] sm:$0xff pattern:$0x73625140]
          %v707 = vld.sshfl [vmem:[#allocation1 + $0x8] sm:$0xff pattern:$0x73625140]
          %v708 = vld.sshfl [vmem:[#allocation1 + $0x10] sm:$0xff pattern:$0x73625140]
          %v709 = vld.sshfl [vmem:[#allocation1 + $0x18] sm:$0xff pattern:$0x73625140]
          %v710 = vld.sshfl [vmem:[#allocation1 + $0x20] sm:$0xff pattern:$0x73625140]
          %v711 = vld.sshfl [vmem:[#allocation1 + $0x28] sm:$0xff pattern:$0x73625140]
          %v712 = vld.sshfl [vmem:[#allocation1 + $0x30] sm:$0xff pattern:$0x73625140]
          %v713 = vld.sshfl [vmem:[#allocation1 + $0x38] sm:$0xff pattern:$0x73625140]
          %714 = vst [vmem:[#allocation1] ss:$4 sm:$0xff] %v535
          %v715 = vld.sshfl [vmem:[#allocation1] sm:$0xff pattern:$0x73625140]
          %v716 = vld.sshfl [vmem:[#allocation1 + $0x8] sm:$0xff pattern:$0x73625140]
          %727 = vmatpush.msra.mxu0 %v551
          %728 = vmatpush.msra.mxu0 %v550
          %729 = vmatpush.msra.mxu0 %v549
          %730 = vmatpush.msra.mxu0 %v548
          %731 = vmatpush.msra.mxu0 %v547
          %732 = vmatpush.msra.mxu0 %v546
          %733 = vmatpush.msra.mxu0 %v545
          %734 = vmatpush.msra.mxu0 %v544
          %735 = vmatpush.msra.mxu0 %v543
          %736 = vmatpush.msra.mxu0 %v542
          %737 = vmatpush.msra.mxu0 %v541
          %738 = vmatpush.msra.mxu0 %v540
          %739 = vmatpush.msra.mxu0 %v539
          %740 = vmatpush.msra.mxu0 %v538
          %741 = vmatpush.msra.mxu0 %v537
          %742 = vmatpush.msra.mxu0 %v536
          %743 = vmatmul.f32.gmra.mxu0 %v706
          %v744 = vpop.f32.mrf.mxu0
          %v745 = vadd.f32 %v698, %v744
          %746 = vdwg.mxu0
          %747 = vmatpush.msra.mxu0 %v567
          %748 = vmatpush.msra.mxu0 %v566
          %749 = vmatpush.msra.mxu0 %v565
          %750 = vmatpush.msra.mxu0 %v564
          %751 = vmatpush.msra.mxu0 %v563
          %752 = vmatpush.msra.mxu0 %v562
          %753 = vmatpush.msra.mxu0 %v561
          %754 = vmatpush.msra.mxu0 %v560
          %755 = vmatpush.msra.mxu0 %v559
          %756 = vmatpush.msra.mxu0 %v558
          %757 = vmatpush.msra.mxu0 %v557
          %758 = vmatpush.msra.mxu0 %v556
          %759 = vmatpush.msra.mxu0 %v555
          %760 = vmatpush.msra.mxu0 %v554
          %761 = vmatpush.msra.mxu0 %v553
          %762 = vmatpush.msra.mxu0 %v552
          %763 = vmatmul.f32.gmra.mxu0 %v707
          %v764 = vpop.f32.mrf.mxu0
          %v765 = vadd.f32 %v745, %v764
          %766 = vdwg.mxu0
          %767 = vmatpush.msra.mxu0 %v583
          %768 = vmatpush.msra.mxu0 %v582
          %769 = vmatpush.msra.mxu0 %v581
          %770 = vmatpush.msra.mxu0 %v580
          %771 = vmatpush.msra.mxu0 %v579
          %772 = vmatpush.msra.mxu0 %v578
          %773 = vmatpush.msra.mxu0 %v577
          %774 = vmatpush.msra.mxu0 %v576
          %775 = vmatpush.msra.mxu0 %v575
          %776 = vmatpush.msra.mxu0 %v574
          %777 = vmatpush.msra.mxu0 %v573
          %778 = vmatpush.msra.mxu0 %v572
          %779 = vmatpush.msra.mxu0 %v571
          %780 = vmatpush.msra.mxu0 %v570
          %781 = vmatpush.msra.mxu0 %v569
          %782 = vmatpush.msra.mxu0 %v568
          %783 = vmatmul.f32.gmra.mxu0 %v708
          %v784 = vpop.f32.mrf.mxu0
          %v785 = vadd.f32 %v765, %v784
          %786 = vdwg.mxu0
          %787 = vmatpush.msra.mxu0 %v599
          %788 = vmatpush.msra.mxu0 %v598
          %789 = vmatpush.msra.mxu0 %v597
          %790 = vmatpush.msra.mxu0 %v596
          %791 = vmatpush.msra.mxu0 %v595
          %792 = vmatpush.msra.mxu0 %v594
          %793 = vmatpush.msra.mxu0 %v593
          %794 = vmatpush.msra.mxu0 %v592
          %795 = vmatpush.msra.mxu0 %v591
          %796 = vmatpush.msra.mxu0 %v590
          %797 = vmatpush.msra.mxu0 %v589
          %798 = vmatpush.msra.mxu0 %v588
          %799 = vmatpush.msra.mxu0 %v587
          %800 = vmatpush.msra.mxu0 %v586
          %801 = vmatpush.msra.mxu0 %v585
          %802 = vmatpush.msra.mxu0 %v584
          %803 = vmatmul.f32.gmra.mxu0 %v709
          %v804 = vpop.f32.mrf.mxu0
          %v805 = vadd.f32 %v785, %v804
          %806 = vdwg.mxu0
          %807 = vmatpush.msra.mxu0 %v615
          %808 = vmatpush.msra.mxu0 %v614
          %809 = vmatpush.msra.mxu0 %v613
          %810 = vmatpush.msra.mxu0 %v612
          %811 = vmatpush.msra.mxu0 %v611
          %812 = vmatpush.msra.mxu0 %v610
          %813 = vmatpush.msra.mxu0 %v609
          %814 = vmatpush.msra.mxu0 %v608
          %815 = vmatpush.msra.mxu0 %v607
          %816 = vmatpush.msra.mxu0 %v606
          %817 = vmatpush.msra.mxu0 %v605
          %818 = vmatpush.msra.mxu0 %v604
          %819 = vmatpush.msra.mxu0 %v603
          %820 = vmatpush.msra.mxu0 %v602
          %821 = vmatpush.msra.mxu0 %v601
          %822 = vmatpush.msra.mxu0 %v600
          %823 = vmatmul.f32.gmra.mxu0 %v710
          %v824 = vpop.f32.mrf.mxu0
          %v825 = vadd.f32 %v805, %v824
          %826 = vdwg.mxu0
          %827 = vmatpush.msra.mxu0 %v631
          %828 = vmatpush.msra.mxu0 %v630
          %829 = vmatpush.msra.mxu0 %v629
          %830 = vmatpush.msra.mxu0 %v628
          %831 = vmatpush.msra.mxu0 %v627
          %832 = vmatpush.msra.mxu0 %v626
          %833 = vmatpush.msra.mxu0 %v625
          %834 = vmatpush.msra.mxu0 %v624
          %835 = vmatpush.msra.mxu0 %v623
          %836 = vmatpush.msra.mxu0 %v622
          %837 = vmatpush.msra.mxu0 %v621
          %838 = vmatpush.msra.mxu0 %v620
          %839 = vmatpush.msra.mxu0 %v619
          %840 = vmatpush.msra.mxu0 %v618
          %841 = vmatpush.msra.mxu0 %v617
          %842 = vmatpush.msra.mxu0 %v616
          %843 = vmatmul.f32.gmra.mxu0 %v711
          %v844 = vpop.f32.mrf.mxu0
          %v845 = vadd.f32 %v825, %v844
          %846 = vdwg.mxu0
          %847 = vmatpush.msra.mxu0 %v647
          %848 = vmatpush.msra.mxu0 %v646
          %849 = vmatpush.msra.mxu0 %v645
          %850 = vmatpush.msra.mxu0 %v644
          %851 = vmatpush.msra.mxu0 %v643
          %852 = vmatpush.msra.mxu0 %v642
          %853 = vmatpush.msra.mxu0 %v641
          %854 = vmatpush.msra.mxu0 %v640
          %855 = vmatpush.msra.mxu0 %v639
          %856 = vmatpush.msra.mxu0 %v638
          %857 = vmatpush.msra.mxu0 %v637
          %858 = vmatpush.msra.mxu0 %v636
          %859 = vmatpush.msra.mxu0 %v635
          %860 = vmatpush.msra.mxu0 %v634
          %861 = vmatpush.msra.mxu0 %v633
          %862 = vmatpush.msra.mxu0 %v632
          %863 = vmatmul.f32.gmra.mxu0 %v712
          %v864 = vpop.f32.mrf.mxu0
          %v865 = vadd.f32 %v845, %v864
          %866 = vdwg.mxu0
          %867 = vmatpush.msra.mxu0 %v663
          %868 = vmatpush.msra.mxu0 %v662
          %869 = vmatpush.msra.mxu0 %v661
          %870 = vmatpush.msra.mxu0 %v660
          %871 = vmatpush.msra.mxu0 %v659
          %872 = vmatpush.msra.mxu0 %v658
          %873 = vmatpush.msra.mxu0 %v657
          %874 = vmatpush.msra.mxu0 %v656
          %875 = vmatpush.msra.mxu0 %v655
          %876 = vmatpush.msra.mxu0 %v654
          %877 = vmatpush.msra.mxu0 %v653
          %878 = vmatpush.msra.mxu0 %v652
          %879 = vmatpush.msra.mxu0 %v651
          %880 = vmatpush.msra.mxu0 %v650
          %881 = vmatpush.msra.mxu0 %v649
          %882 = vmatpush.msra.mxu0 %v648
          %883 = vmatmul.f32.gmra.mxu0 %v713
          %v884 = vpop.f32.mrf.mxu0
          %v885 = vadd.f32 %v865, %v884
          %886 = vdwg.mxu0
          %887 = vmatpush.msra.mxu0 %v679
          %888 = vmatpush.msra.mxu0 %v678
          %889 = vmatpush.msra.mxu0 %v677
          %890 = vmatpush.msra.mxu0 %v676
          %891 = vmatpush.msra.mxu0 %v675
          %892 = vmatpush.msra.mxu0 %v674
          %893 = vmatpush.msra.mxu0 %v673
          %894 = vmatpush.msra.mxu0 %v672
          %895 = vmatpush.msra.mxu0 %v671
          %896 = vmatpush.msra.mxu0 %v670
          %897 = vmatpush.msra.mxu0 %v669
          %898 = vmatpush.msra.mxu0 %v668
          %899 = vmatpush.msra.mxu0 %v667
          %900 = vmatpush.msra.mxu0 %v666
          %901 = vmatpush.msra.mxu0 %v665
          %902 = vmatpush.msra.mxu0 %v664
          %903 = vmatmul.f32.gmra.mxu0 %v715
          %v904 = vpop.f32.mrf.mxu0
          %v905 = vadd.f32 %v885, %v904
          %906 = vdwg.mxu0
          %907 = vmatpush.msra.mxu0 %v695
          %908 = vmatpush.msra.mxu0 %v694
          %909 = vmatpush.msra.mxu0 %v693
          %910 = vmatpush.msra.mxu0 %v692
          %911 = vmatpush.msra.mxu0 %v691
          %912 = vmatpush.msra.mxu0 %v690
          %913 = vmatpush.msra.mxu0 %v689
          %914 = vmatpush.msra.mxu0 %v688
          %915 = vmatpush.msra.mxu0 %v687
          %916 = vmatpush.msra.mxu0 %v686
          %917 = vmatpush.msra.mxu0 %v685
          %918 = vmatpush.msra.mxu0 %v684
          %919 = vmatpush.msra.mxu0 %v683
          %920 = vmatpush.msra.mxu0 %v682
          %921 = vmatpush.msra.mxu0 %v681
          %922 = vmatpush.msra.mxu0 %v680
          %923 = vmatmul.f32.gmra.mxu0 %v716
          %v924 = vpop.f32.mrf.mxu0
          %v925 = vadd.f32 %v905, %v924
          %926 = vdwg.mxu0
          %v927 = vmax.f32 %v925, 0.0
          %v928 = vld [vmem:[#allocation8] sm:$0xff]
          %v929 = vld [vmem:[#allocation8 + $0x8] sm:$0xff]
          %v930 = vld [vmem:[#allocation8 + $0x10] sm:$0xff]
          %v931 = vld [vmem:[#allocation8 + $0x18] sm:$0xff]
          %v932 = vld [vmem:[#allocation8 + $0x20] sm:$0xff]
          %v933 = vld [vmem:[#allocation8 + $0x28] sm:$0xff]
          %v934 = vld [vmem:[#allocation8 + $0x30] sm:$0xff]
          %v935 = vld [vmem:[#allocation8 + $0x38] sm:$0xff]
          %v936 = vld [vmem:[#allocation8 + $0x40] sm:$0xff]
          %v937 = vld [vmem:[#allocation8 + $0x48] sm:$0xff]
          %v938 = vld [vmem:[#allocation8 + $0x50] sm:$0xff]
          %v939 = vld [vmem:[#allocation8 + $0x58] sm:$0xff]
          %v940 = vld [vmem:[#allocation8 + $0x60] sm:$0xff]
          %v941 = vld [vmem:[#allocation8 + $0x68] sm:$0xff]
          %v942 = vld [vmem:[#allocation8 + $0x70] sm:$0xff]
          %v943 = vld [vmem:[#allocation8 + $0x78] sm:$0xff]
          %v944 = vld [vmem:[%s4] sm:$0x1]
          %v946 = vperm.slane %v944, 0
          %948 = vmatpush.msra.mxu0 %v943
          %949 = vmatpush.msra.mxu0 %v942
          %950 = vmatpush.msra.mxu0 %v941
          %951 = vmatpush.msra.mxu0 %v940
          %952 = vmatpush.msra.mxu0 %v939
          %953 = vmatpush.msra.mxu0 %v938
          %954 = vmatpush.msra.mxu0 %v937
          %955 = vmatpush.msra.mxu0 %v936
          %956 = vmatpush.msra.mxu0 %v935
          %957 = vmatpush.msra.mxu0 %v934
          %958 = vmatpush.msra.mxu0 %v933
          %959 = vmatpush.msra.mxu0 %v932
          %960 = vmatpush.msra.mxu0 %v931
          %961 = vmatpush.msra.mxu0 %v930
          %962 = vmatpush.msra.mxu0 %v929
          %963 = vmatpush.msra.mxu0 %v928
          %964 = vmatmul.f32.gmra.mxu0 %v927
          %v965 = vpop.f32.mrf.mxu0
          %v966 = vadd.f32 %v946, %v965
          %967 = vdwg.mxu0
          %968 = vst [vmem:[#allocation9] sm:$0x3] %v966
        $region60: #{tpu_custom_call.1} parent=39 // pred_fallthru
          _
        // Predicated region
        $region61: #{tpu_custom_call.1} parent=39 // pred_check
          %p969 = pneg %p163
        $region62: #{tpu_custom_call.1} parent=39 // pred_check_branch
          %971 = sbr.rel (%p969) target = $region64
        $region63: #{tpu_custom_call.1} parent=39 // pred_region
          %973 = vsyncadd [#allocation5], 0
          %s974 = smul.addr %s25, 2
          %s975 = scalar_lea.hbm %s5, %s974
          %s977 = sshll.u32 [#allocation9], 4
          %s978 = int_to_ptr.vmem [resolvable:$true] %s977
          %s979 = sshll.u32 %s975, 4
          %s980 = int_to_ptr.hbm [resolvable:$true] %s979
          %982 = dma.vmem_to_hbm [thread:$0]  %s978, 32, %s980, [#allocation5]
        $region64: #{tpu_custom_call.1} parent=39 // pred_fallthru
          _
        // Predicated region
        $region65: #{tpu_custom_call.1} parent=39 // pred_check
          %p983 = pneg %p163
        $region66: #{tpu_custom_call.1} parent=39 // pred_check_branch
          %985 = sbr.rel (%p983) target = $region68
        $region67: #{tpu_custom_call.1} parent=39 // pred_region
          %987 = dma.done [#allocation5], 32
        $region68: #{tpu_custom_call.1} parent=39 // pred_fallthru
          _
      $region40: #{tpu_custom_call.1} parent=5 // pred_fallthru
        _
      %p988 = scmp.le.s32.totalorder 2, %s16
      // Predicated region
      $region69: #{tpu_custom_call.1} parent=5 // pred_check
        %p989 = pneg %p988
      $region70: #{tpu_custom_call.1} parent=5 // pred_check_branch
        %991 = sbr.rel (%p989) target = $region72
      $region71: #{tpu_custom_call.1} parent=5 // pred_region
        %s992 = ssub.s32 %s16, 2
      $region72: #{tpu_custom_call.1} parent=5 // pred_fallthru
        _
    $region6: #{tpu_custom_call.1} parent=1 // loop_footer
      %s20 = sadd.s32 1, %s16
    $region7: #{tpu_custom_call.1} parent=1 // loop_footer_branch
      %15 = sbr.rel target = $region3
    $region8: #{tpu_custom_call.1} parent=1 // loop_exit
      _
    %993 = vsyncpa [#allocation4], 1
    %s994 = scalar_lea.sflag [#allocation4], 1
    %995 = vsyncpa %s994, 1
    %996 = vsyncpa [#allocation7], 1
    %997 = vsyncpa [#allocation5], 1
    %s998 = scalar_lea.sflag [#allocation5], 1
    %999 = vsyncpa %s998, 1

// kernel: tpu_custom_call.1
$region0: #{tpu_custom_call.1}
  #allocation0 [shape = 'u32[]', space=smem, size = 0x4, offset = 0x4, fixed_abs, tag = 'smem constant byte address 0x4 - core index']
  #allocation1 [shape = 'u32[72,128]{1,0:T(1,128)}', space=vmem, size = 0x9000, scoped, tag = 'internal scratch']
  #allocation2 [shape = 'f32[2,1280]{1,0:T(2,128)}', space=vmem, size = 0x2800, scoped, tag = 'scratch operand']
  %s0 = inlined_call_operand.hbm [shape: f32[2,64,1280], index: 0, kind: input, shape index: {}]
  %s1 = inlined_call_operand.hbm [shape: f32[1280,128], index: 1, kind: input, shape index: {}]
  %s2 = inlined_call_operand.vmem [shape: f32[1,128], index: 2, kind: input, shape index: {}]
  %s3 = inlined_call_operand.hbm [shape: f32[128,128], index: 3, kind: input, shape index: {}]
  %s4 = inlined_call_operand.vmem [shape: f32[1,128], index: 4, kind: input, shape index: {}]
  %s5 = inlined_call_operand.hbm [shape: f32[2,128], index: 5, kind: output, shape index: {}]
  %s6 = sld [smem:[#allocation0]]
  $region73: #{tpu_custom_call.1} parent=0
    _
  %s8 = ssub.s32 1, %s6
  %s9 = scalar_select 0, %s8, %s6
  $region1: #{tpu_custom_call.1} parent=0
    #allocation3 [shape = 'u8[163840]{0}', space=vmem, size = 0x28000, scoped, tag = 'input window, operand 0']
    #allocation4 [shape = 's32[2]{0}', space=sflag, size = 0x8, scoped, tag = 'scoped memory for tpu_custom_call.1']
    #allocation5 [shape = 's32[2]{0}', space=sflag, size = 0x8, scoped, tag = 'scoped memory for tpu_custom_call.1']
    #allocation6 [shape = 'u8[655360]{0}', space=vmem, size = 0xa0000, scoped, tag = 'input window, operand 1, single buffered']
    #allocation7 [shape = 's32[1]{0}', space=sflag, size = 0x4, scoped, tag = 'scoped memory for tpu_custom_call.1']
    #allocation8 [shape = 'u8[65536]{0}', space=vmem, size = 0x10000, scoped, tag = 'input window, operand 3, single buffered']
    #allocation9 [shape = 'u8[1024]{0}', space=vmem, size = 0x400, scoped, tag = 'output window, operand 0, single buffered']
    %10 = vsyncpa [#allocation4], 0
    %s11 = scalar_lea.sflag [#allocation4], 1
    %12 = vsyncpa %s11, 0
    %13 = vsyncpa [#allocation7], 0
    %14 = vsyncpa [#allocation5], 0
    loop: start=0, step=1, limit=10
    $region2: #{tpu_custom_call.1} parent=1 // loop_pre_header
      _
    $region3: #{tpu_custom_call.1} parent=1 // loop_header
      %s16 = sphi 0, %s20
      %p17 = scmp.ge.s32.totalorder %s16, 10
      %s23 = sphi 0, %s35
      %s24 = sphi 0, %s31
      %s25 = sphi 0, %s23
      %s26 = sphi 0, %s24
      %s27 = sphi 0, %s25
      %s28 = sphi 0, %s26
      %s40 = sphi 0, %s42
      %s43 = sphi 0, %s40
      %s44 = sphi 0, %s43
      %s60 = sphi 0, %s44
      %s64 = sphi 0, %s64
      %s66 = sphi 0, %s64
      %s67 = sphi 0, %s66
      %s81 = sphi 0, %s67
      %s85 = sphi 0, %s85
      %s87 = sphi 0, %s85
      %s88 = sphi 0, %s87
      %s102 = sphi 0, %s88
      %s106 = sphi 0, %s106
      %s108 = sphi 0, %s106
      %s109 = sphi 0, %s108
      %s123 = sphi 0, %s109
      %s127 = sphi 0, %s127
      %s129 = sphi 0, %s127
      %s130 = sphi 0, %s129
      %s144 = sphi 0, %s130
      %s150 = sphi 0, %s152
      %s153 = sphi 0, %s150
      %s154 = sphi 0, %s153
      %s170 = sphi 0, %s154
    $region4: #{tpu_custom_call.1} parent=1 // loop_header_branch
      %19 = sbr.rel (%p17) target = $region8
    $region5: #{tpu_custom_call.1} parent=1 // loop_body
      %s21 = ssub.s32 %s16, 1
      %s22 = ssub.s32 %s16, 2
      %s29 = sadd.s32 1, %s24
      %p30 = scmp.ge.s32.totalorder %s29, 8
      %s31 = scalar_select %p30, 0, %s29
      %s32 = sadd.s32 1, %s23
      %s33 = scalar_select %p30, %s32, %s23
      %p34 = scmp.ge.s32.totalorder %s33, 1
      %s35 = scalar_select %p34, 0, %s33
      %s36 = ssub.s32 %s23, %s35
      %s37 = ssub.s32 %s24, %s31
      %s38 = sor.u32 %s36, %s37
      %p39 = scmp.eq.s32.totalorder %s38, 0
      %s41 = sadd.s32 %s40, 1
      %s42 = scalar_select %p39, %s40, %s41
      %p45 = pneg %p39
      %p46 = scmp.eq.s32.totalorder %s16, 7
      %p47 = por %p45, %p46
      %p48 = scmp.ne.s32.totalorder %s40, %s43
      %p49 = scmp.eq.s32.totalorder %s16, 0
      %p50 = por %p48, %p49
      %p51 = scmp.ne.s32.totalorder %s40, %s43
      %p52 = scmp.eq.s32.totalorder %s21, 7
      %p53 = por %p51, %p52
      %p54 = scmp.ne.s32.totalorder %s43, %s44
      %p55 = scmp.eq.s32.totalorder %s21, 0
      %p56 = por %p54, %p55
      %p57 = scmp.ne.s32.totalorder %s43, %s44
      %p58 = scmp.eq.s32.totalorder %s22, 7
      %p59 = por %p57, %p58
      %p61 = scmp.ne.s32.totalorder %s44, %s60
      %p62 = scmp.eq.s32.totalorder %s22, 0
      %p63 = por %p61, %p62
      %s65 = sadd.s32 %s64, 1
      %p68 = scmp.eq.s32.totalorder %s16, 7
      %p69 = scmp.ne.s32.totalorder %s64, %s66
      %p70 = scmp.eq.s32.totalorder %s16, 0
      %p71 = por %p69, %p70
      %p72 = scmp.ne.s32.totalorder %s64, %s66
      %p73 = scmp.eq.s32.totalorder %s21, 7
      %p74 = por %p72, %p73
      %p75 = scmp.ne.s32.totalorder %s66, %s67
      %p76 = scmp.eq.s32.totalorder %s21, 0
      %p77 = por %p75, %p76
      %p78 = scmp.ne.s32.totalorder %s66, %s67
      %p79 = scmp.eq.s32.totalorder %s22, 7
      %p80 = por %p78, %p79
      %p82 = scmp.ne.s32.totalorder %s67, %s81
      %p83 = scmp.eq.s32.totalorder %s22, 0
      %p84 = por %p82, %p83
      %s86 = sadd.s32 %s85, 1
      %p89 = scmp.eq.s32.totalorder %s16, 7
      %p90 = scmp.ne.s32.totalorder %s85, %s87
      %p91 = scmp.eq.s32.totalorder %s16, 0
      %p92 = por %p90, %p91
      %p93 = scmp.ne.s32.totalorder %s85, %s87
      %p94 = scmp.eq.s32.totalorder %s21, 7
      %p95 = por %p93, %p94
      %p96 = scmp.ne.s32.totalorder %s87, %s88
      %p97 = scmp.eq.s32.totalorder %s21, 0
      %p98 = por %p96, %p97
      %p99 = scmp.ne.s32.totalorder %s87, %s88
      %p100 = scmp.eq.s32.totalorder %s22, 7
      %p101 = por %p99, %p100
      %p103 = scmp.ne.s32.totalorder %s88, %s102
      %p104 = scmp.eq.s32.totalorder %s22, 0
      %p105 = por %p103, %p104
      %s107 = sadd.s32 %s106, 1
      %p110 = scmp.eq.s32.totalorder %s16, 7
      %p111 = scmp.ne.s32.totalorder %s106, %s108
      %p112 = scmp.eq.s32.totalorder %s16, 0
      %p113 = por %p111, %p112
      %p114 = scmp.ne.s32.totalorder %s106, %s108
      %p115 = scmp.eq.s32.totalorder %s21, 7
      %p116 = por %p114, %p115
      %p117 = scmp.ne.s32.totalorder %s108, %s109
      %p118 = scmp.eq.s32.totalorder %s21, 0
      %p119 = por %p117, %p118
      %p120 = scmp.ne.s32.totalorder %s108, %s109
      %p121 = scmp.eq.s32.totalorder %s22, 7
      %p122 = por %p120, %p121
      %p124 = scmp.ne.s32.totalorder %s109, %s123
      %p125 = scmp.eq.s32.totalorder %s22, 0
      %p126 = por %p124, %p125
      %s128 = sadd.s32 %s127, 1
      %p131 = scmp.eq.s32.totalorder %s16, 7
      %p132 = scmp.ne.s32.totalorder %s127, %s129
      %p133 = scmp.eq.s32.totalorder %s16, 0
      %p134 = por %p132, %p133
      %p135 = scmp.ne.s32.totalorder %s127, %s129
      %p136 = scmp.eq.s32.totalorder %s21, 7
      %p137 = por %p135, %p136
      %p138 = scmp.ne.s32.totalorder %s129, %s130
      %p139 = scmp.eq.s32.totalorder %s21, 0
      %p140 = por %p138, %p139
      %p141 = scmp.ne.s32.totalorder %s129, %s130
      %p142 = scmp.eq.s32.totalorder %s22, 7
      %p143 = por %p141, %p142
      %p145 = scmp.ne.s32.totalorder %s130, %s144
      %p146 = scmp.eq.s32.totalorder %s22, 0
      %p147 = por %p145, %p146
      %s148 = ssub.s32 %s23, %s35
      %p149 = scmp.eq.s32.totalorder %s148, 0
      %s151 = sadd.s32 %s150, 1
      %s152 = scalar_select %p149, %s150, %s151
      %p155 = pneg %p149
      %p156 = scmp.eq.s32.totalorder %s16, 7
      %p157 = por %p155, %p156
      %p158 = scmp.ne.s32.totalorder %s150, %s153
      %p159 = scmp.eq.s32.totalorder %s16, 0
      %p160 = por %p158, %p159
      %p161 = scmp.ne.s32.totalorder %s150, %s153
      %p162 = scmp.eq.s32.totalorder %s21, 7
      %p163 = por %p161, %p162
      %p164 = scmp.ne.s32.totalorder %s153, %s154
      %p165 = scmp.eq.s32.totalorder %s21, 0
      %p166 = por %p164, %p165
      %p167 = scmp.ne.s32.totalorder %s153, %s154
      %p168 = scmp.eq.s32.totalorder %s22, 7
      %p169 = por %p167, %p168
      %p171 = scmp.ne.s32.totalorder %s154, %s170
      %p172 = scmp.eq.s32.totalorder %s22, 0
      %p173 = por %p171, %p172
      %p174 = scmp.le.s32.totalorder 1, %s16
      %p175 = scmp.lt.s32.totalorder %s16, 9
      %p176 = pnand %p174, %p175
      %p177 = pneg %p176
      // Predicated region
      $region9: #{tpu_custom_call.1} parent=5 // pred_check
        _
      $region10: #{tpu_custom_call.1} parent=5 // pred_check_branch
        %179 = sbr.rel (%p176) target = $region12
      $region11: #{tpu_custom_call.1} parent=5 // pred_region
        %s180 = ssub.s32 %s16, 1
        // Predicated region
        $region13: #{tpu_custom_call.1} parent=11 // pred_check
          %p181 = pneg %p77
        $region14: #{tpu_custom_call.1} parent=11 // pred_check_branch
          %183 = sbr.rel (%p181) target = $region16
        $region15: #{tpu_custom_call.1} parent=11 // pred_region
          %185 = vsyncadd [#allocation7], 0
          %s186 = sshll.u32 %s1, 4
          %s187 = int_to_ptr.hbm [resolvable:$true] %s186
          %s188 = sshll.u32 [#allocation6], 4
          %s189 = int_to_ptr.vmem [resolvable:$true] %s188
          %194 = dma.hbm_to_vmem [thread:$0]  %s187, 20480, %s189, [#allocation7], 128, 128, 8
        $region16: #{tpu_custom_call.1} parent=11 // pred_fallthru
          _
        // Predicated region
        $region17: #{tpu_custom_call.1} parent=11 // pred_check
          %p195 = pneg %p98
        $region18: #{tpu_custom_call.1} parent=11 // pred_check_branch
          %197 = sbr.rel (%p195) target = $region20
        $region19: #{tpu_custom_call.1} parent=11 // pred_region
          _
        $region20: #{tpu_custom_call.1} parent=11 // pred_fallthru
          _
        // Predicated region
        $region21: #{tpu_custom_call.1} parent=11 // pred_check
          %p198 = pneg %p119
        $region22: #{tpu_custom_call.1} parent=11 // pred_check_branch
          %200 = sbr.rel (%p198) target = $region24
        $region23: #{tpu_custom_call.1} parent=11 // pred_region
          %202 = vsyncadd [#allocation7], 0
          %s203 = sshll.u32 %s3, 4
          %s204 = int_to_ptr.hbm [resolvable:$true] %s203
          %s205 = sshll.u32 [#allocation8], 4
          %s206 = int_to_ptr.vmem [resolvable:$true] %s205
          %211 = dma.hbm_to_vmem [thread:$0]  %s204, 2048, %s206, [#allocation7], 128, 128, 8
        $region24: #{tpu_custom_call.1} parent=11 // pred_fallthru
          _
        // Predicated region
        $region25: #{tpu_custom_call.1} parent=11 // pred_check
          %p212 = pneg %p140
        $region26: #{tpu_custom_call.1} parent=11 // pred_check_branch
          %214 = sbr.rel (%p212) target = $region28
        $region27: #{tpu_custom_call.1} parent=11 // pred_region
          _
        $region28: #{tpu_custom_call.1} parent=11 // pred_fallthru
          _
      $region12: #{tpu_custom_call.1} parent=5 // pred_fallthru
        _
      %p215 = scmp.lt.s32.totalorder %s16, 8
      // Predicated region
      $region29: #{tpu_custom_call.1} parent=5 // pred_check
        %p216 = pneg %p215
      $region30: #{tpu_custom_call.1} parent=5 // pred_check_branch
        %218 = sbr.rel (%p216) target = $region32
      $region31: #{tpu_custom_call.1} parent=5 // pred_region
        // Predicated region
        $region33: #{tpu_custom_call.1} parent=31 // pred_check
          %p219 = pneg %p50
        $region34: #{tpu_custom_call.1} parent=31 // pred_check_branch
          %221 = sbr.rel (%p219) target = $region36
        $region35: #{tpu_custom_call.1} parent=31 // pred_region
          %s222 = sand.u32 %s40, 1
          %s223 = scalar_lea.sflag [#allocation4], %s222
          %s224 = sand.u32 %s40, 1
          %s225 = smul.addr %s224, 160
          %s226 = scalar_lea.vmem [#allocation3], %s225
          %s227 = smul.u32 2, %s23
          %229 = vsyncadd %s223, 0
          %s230 = smul.addr %s24, 10
          %s231 = smul.addr %s227, 80
          %s232 = sadd.s32 %s230, %s231
          %s233 = smul.addr %s232, 8
          %s234 = scalar_lea.hbm %s0, %s233
          %s235 = sshll.u32 %s234, 4
          %s236 = int_to_ptr.hbm [resolvable:$true] %s235
          %s237 = sshll.u32 %s226, 4
          %s238 = int_to_ptr.vmem [resolvable:$true] %s237
          %243 = dma.hbm_to_vmem [thread:$0]  %s236, 2560, %s238, %s223, 10240, 1280, 80
        $region36: #{tpu_custom_call.1} parent=31 // pred_fallthru
          _
      $region32: #{tpu_custom_call.1} parent=5 // pred_fallthru
        _
      %p244 = scmp.le.s32.totalorder 1, %s16
      %p245 = scmp.lt.s32.totalorder %s16, 9
      %p246 = pnand %p244, %p245
      %p247 = pneg %p246
      // Predicated region
      $region37: #{tpu_custom_call.1} parent=5 // pred_check
        _
      $region38: #{tpu_custom_call.1} parent=5 // pred_check_branch
        %249 = sbr.rel (%p246) target = $region40
      $region39: #{tpu_custom_call.1} parent=5 // pred_region
        %s250 = ssub.s32 %s16, 1
        %s251 = sand.u32 %s43, 1
        %s252 = scalar_lea.sflag [#allocation4], %s251
        %s253 = sand.u32 %s43, 1
        %s254 = smul.addr %s253, 160
        %s255 = scalar_lea.vmem [#allocation3], %s254
        // Predicated region
        $region41: #{tpu_custom_call.1} parent=39 // pred_check
          %p256 = pneg %p56
        $region42: #{tpu_custom_call.1} parent=39 // pred_check_branch
          %258 = sbr.rel (%p256) target = $region44
        $region43: #{tpu_custom_call.1} parent=39 // pred_region
          %260 = dma.done %s252, 2560
        $region44: #{tpu_custom_call.1} parent=39 // pred_fallthru
          _
        // Predicated region
        $region45: #{tpu_custom_call.1} parent=39 // pred_check
          %p261 = pneg %p77
        $region46: #{tpu_custom_call.1} parent=39 // pred_check_branch
          %263 = sbr.rel (%p261) target = $region48
        $region47: #{tpu_custom_call.1} parent=39 // pred_region
          %265 = dma.done [#allocation7], 20480
        $region48: #{tpu_custom_call.1} parent=39 // pred_fallthru
          _
        // Predicated region
        $region49: #{tpu_custom_call.1} parent=39 // pred_check
          %p266 = pneg %p119
        $region50: #{tpu_custom_call.1} parent=39 // pred_check_branch
          %268 = sbr.rel (%p266) target = $region52
        $region51: #{tpu_custom_call.1} parent=39 // pred_region
          %270 = dma.done [#allocation7], 2048
        $region52: #{tpu_custom_call.1} parent=39 // pred_fallthru
          _
        %s271 = sand.u32 %s43, 1
        %s272 = scalar_lea.sflag [#allocation4], %s271
        %s273 = sand.u32 %s43, 1
        %s274 = smul.addr %s273, 160
        %s275 = scalar_lea.vmem [#allocation3], %s274
        %p276 = pneg %p56
        %p277 = pneg %p53
        %p278 = pneg %p77
        %p279 = pneg %p74
        %p280 = pneg %p98
        %p281 = pneg %p95
        %p282 = pneg %p119
        %p283 = pneg %p116
        %p284 = pneg %p140
        %p285 = pneg %p137
        %p286 = pneg %p166
        %p287 = pneg %p163
        %s288 = smul.u32 2, %s25
        %p289 = scmp.eq.s32.totalorder %s26, 0
        // Predicated region
        $region53: #{tpu_custom_call.1} parent=39 // pred_check
          %p290 = pneg %p289
        $region54: #{tpu_custom_call.1} parent=39 // pred_check_branch
          %292 = sbr.rel (%p290) target = $region56
        $region55: #{tpu_custom_call.1} parent=39 // pred_region
          %293 = vst [vmem:[#allocation2] sm:$0xff] 0.0
          %294 = vst [vmem:[#allocation2 + $0x8] sm:$0xff] 0.0
          %295 = vst [vmem:[#allocation2 + $0x10] sm:$0xf] 0.0
        $region56: #{tpu_custom_call.1} parent=39 // pred_fallthru
          _
        %v296 = vld [vmem:[#allocation2] sm:$0xff]
        %v297 = vld [vmem:[#allocation2 + $0x8] sm:$0xff]
        %v298 = vld [vmem:[#allocation2 + $0x10] sm:$0xf]
        %v299 = vld [vmem:[%s255] sm:$0xff]
        %v300 = vld [vmem:[%s255 + $0x8] sm:$0xff]
        %v301 = vld [vmem:[%s255 + $0x10] sm:$0xff]
        %v302 = vld [vmem:[%s255 + $0x18] sm:$0xff]
        %v303 = vld [vmem:[%s255 + $0x20] sm:$0xff]
        %v304 = vld [vmem:[%s255 + $0x28] sm:$0xff]
        %v305 = vld [vmem:[%s255 + $0x30] sm:$0xff]
        %v306 = vld [vmem:[%s255 + $0x38] sm:$0xff]
        %v307 = vld [vmem:[%s255 + $0x40] sm:$0xff]
        %v308 = vld [vmem:[%s255 + $0x48] sm:$0xff]
        %v309 = vld [vmem:[%s255 + $0x50] sm:$0xff]
        %v310 = vld [vmem:[%s255 + $0x58] sm:$0xff]
        %v311 = vld [vmem:[%s255 + $0x60] sm:$0xff]
        %v312 = vld [vmem:[%s255 + $0x68] sm:$0xff]
        %v313 = vld [vmem:[%s255 + $0x70] sm:$0xff]
        %v314 = vld [vmem:[%s255 + $0x78] sm:$0xff]
        %v315 = vld [vmem:[%s255 + $0x80] sm:$0xff]
        %v316 = vld [vmem:[%s255 + $0x88] sm:$0xff]
        %v317 = vld [vmem:[%s255 + $0x90] sm:$0xff]
        %v318 = vld [vmem:[%s255 + $0x98] sm:$0xff]
        %v319 = vrot.slane %v299, 4
        %v320 = vadd.f32 %v299, %v319
        %v321 = vrot.slane %v320, 2
        %v322 = vadd.f32 %v320, %v321
        %v323 = vrot.slane %v322, 1
        %v324 = vadd.f32 %v322, %v323
        %v325 = vrot.slane %v300, 4
        %v326 = vadd.f32 %v300, %v325
        %v327 = vrot.slane %v326, 2
        %v328 = vadd.f32 %v326, %v327
        %v329 = vrot.slane %v328, 1
        %v330 = vadd.f32 %v328, %v329
        %v331 = vrot.slane %v301, 4
        %v332 = vadd.f32 %v301, %v331
        %v333 = vrot.slane %v332, 2
        %v334 = vadd.f32 %v332, %v333
        %v335 = vrot.slane %v334, 1
        %v336 = vadd.f32 %v334, %v335
        %v337 = vrot.slane %v302, 4
        %v338 = vadd.f32 %v302, %v337
        %v339 = vrot.slane %v338, 2
        %v340 = vadd.f32 %v338, %v339
        %v341 = vrot.slane %v340, 1
        %v342 = vadd.f32 %v340, %v341
        %v343 = vrot.slane %v303, 4
        %v344 = vadd.f32 %v303, %v343
        %v345 = vrot.slane %v344, 2
        %v346 = vadd.f32 %v344, %v345
        %v347 = vrot.slane %v346, 1
        %v348 = vadd.f32 %v346, %v347
        %v349 = vrot.slane %v304, 4
        %v350 = vadd.f32 %v304, %v349
        %v351 = vrot.slane %v350, 2
        %v352 = vadd.f32 %v350, %v351
        %v353 = vrot.slane %v352, 1
        %v354 = vadd.f32 %v352, %v353
        %v355 = vrot.slane %v305, 4
        %v356 = vadd.f32 %v305, %v355
        %v357 = vrot.slane %v356, 2
        %v358 = vadd.f32 %v356, %v357
        %v359 = vrot.slane %v358, 1
        %v360 = vadd.f32 %v358, %v359
        %v361 = vrot.slane %v306, 4
        %v362 = vadd.f32 %v306, %v361
        %v363 = vrot.slane %v362, 2
        %v364 = vadd.f32 %v362, %v363
        %v365 = vrot.slane %v364, 1
        %v366 = vadd.f32 %v364, %v365
        %v367 = vrot.slane %v307, 4
        %v368 = vadd.f32 %v307, %v367
        %v369 = vrot.slane %v368, 2
        %v370 = vadd.f32 %v368, %v369
        %v371 = vrot.slane %v370, 1
        %v372 = vadd.f32 %v370, %v371
        %v373 = vrot.slane %v308, 4
        %v374 = vadd.f32 %v308, %v373
        %v375 = vrot.slane %v374, 2
        %v376 = vadd.f32 %v374, %v375
        %v377 = vrot.slane %v376, 1
        %v378 = vadd.f32 %v376, %v377
        %v379 = vrot.slane %v309, 4
        %v380 = vadd.f32 %v309, %v379
        %v381 = vrot.slane %v380, 2
        %v382 = vadd.f32 %v380, %v381
        %v383 = vrot.slane %v382, 1
        %v384 = vadd.f32 %v382, %v383
        %v385 = vrot.slane %v310, 4
        %v386 = vadd.f32 %v310, %v385
        %v387 = vrot.slane %v386, 2
        %v388 = vadd.f32 %v386, %v387
        %v389 = vrot.slane %v388, 1
        %v390 = vadd.f32 %v388, %v389
        %v391 = vrot.slane %v311, 4
        %v392 = vadd.f32 %v311, %v391
        %v393 = vrot.slane %v392, 2
        %v394 = vadd.f32 %v392, %v393
        %v395 = vrot.slane %v394, 1
        %v396 = vadd.f32 %v394, %v395
        %v397 = vrot.slane %v312, 4
        %v398 = vadd.f32 %v312, %v397
        %v399 = vrot.slane %v398, 2
        %v400 = vadd.f32 %v398, %v399
        %v401 = vrot.slane %v400, 1
        %v402 = vadd.f32 %v400, %v401
        %v403 = vrot.slane %v313, 4
        %v404 = vadd.f32 %v313, %v403
        %v405 = vrot.slane %v404, 2
        %v406 = vadd.f32 %v404, %v405
        %v407 = vrot.slane %v406, 1
        %v408 = vadd.f32 %v406, %v407
        %v409 = vrot.slane %v314, 4
        %v410 = vadd.f32 %v314, %v409
        %v411 = vrot.slane %v410, 2
        %v412 = vadd.f32 %v410, %v411
        %v413 = vrot.slane %v412, 1
        %v414 = vadd.f32 %v412, %v413
        %v415 = vrot.slane %v315, 4
        %v416 = vadd.f32 %v315, %v415
        %v417 = vrot.slane %v416, 2
        %v418 = vadd.f32 %v416, %v417
        %v419 = vrot.slane %v418, 1
        %v420 = vadd.f32 %v418, %v419
        %v421 = vrot.slane %v316, 4
        %v422 = vadd.f32 %v316, %v421
        %v423 = vrot.slane %v422, 2
        %v424 = vadd.f32 %v422, %v423
        %v425 = vrot.slane %v424, 1
        %v426 = vadd.f32 %v424, %v425
        %v427 = vrot.slane %v317, 4
        %v428 = vadd.f32 %v317, %v427
        %v429 = vrot.slane %v428, 2
        %v430 = vadd.f32 %v428, %v429
        %v431 = vrot.slane %v430, 1
        %v432 = vadd.f32 %v430, %v431
        %v433 = vrot.slane %v318, 4
        %v434 = vadd.f32 %v318, %v433
        %v435 = vrot.slane %v434, 2
        %v436 = vadd.f32 %v434, %v435
        %v437 = vrot.slane %v436, 1
        %v438 = vadd.f32 %v436, %v437
        %v459 = vrot.slane %v330, 6
        %v460 = vrot.slane %v336, 4
        %v461 = vrot.slane %v342, 2
        %v462 = vrot.slane %v354, 6
        %v463 = vrot.slane %v360, 4
        %v464 = vrot.slane %v366, 2
        %v465 = vrot.slane %v378, 6
        %v466 = vrot.slane %v390, 6
        %v467 = vrot.slane %v396, 4
        %v468 = vrot.slane %v402, 2
        %v469 = vrot.slane %v414, 6
        %v470 = vrot.slane %v420, 4
        %v471 = vrot.slane %v426, 2
        %v472 = vrot.slane %v438, 6
        %vm473 = vcmask 1041408
        %v474 = vsel %vm473, %v324, %v459
        %vm475 = vcmask 1045508
        %v476 = vsel %vm475, %v460, %v461
        %vm477 = vcmask 1043456
        %v478 = vsel %vm477, %v474, %v476
        %v479 = vsel %vm473, %v348, %v462
        %v480 = vsel %vm475, %v463, %v464
        %v481 = vsel %vm477, %v479, %v480
        %v482 = vsel %vm473, %v372, %v465
        %v483 = vsel %vm473, %v384, %v466
        %v484 = vsel %vm475, %v467, %v468
        %v485 = vsel %vm477, %v483, %v484
        %v486 = vsel %vm473, %v408, %v469
        %v487 = vsel %vm475, %v470, %v471
        %v488 = vsel %vm477, %v486, %v487
        %v489 = vsel %vm473, %v432, %v472
        %vm490 = vcmask 1044484
        %v491 = vsel %vm490, %v478, %v478
        %vm492 = vcmask 1046534
        %v493 = vsel %vm492, %v478, %v491
        %v494 = vrot.slane %v485, 7
        %vm495 = vcmask 1041409
        %v496 = vsel %vm495, %v494, %v493
        %vm497 = vcmask 1043459
        %v498 = vsel %vm497, %v494, %v496
        %vm499 = vcmask 1045509
        %v500 = vsel %vm499, %v494, %v498
        %vm501 = vcmask 1047559
        %v502 = vsel %vm501, %v494, %v500
        %v503 = vsel %vm490, %v481, %v481
        %v504 = vsel %vm492, %v481, %v503
        %v505 = vrot.slane %v488, 7
        %v506 = vsel %vm495, %v505, %v504
        %v507 = vsel %vm497, %v505, %v506
        %v508 = vsel %vm499, %v505, %v507
        %v509 = vsel %vm501, %v505, %v508
        %v510 = vsel %vm490, %v482, %v482
        %v511 = vsel %vm492, %v482, %v510
        %v512 = vrot.slane %v489, 7
        %v513 = vsel %vm495, %v512, %v511
        %v514 = vsel %vm497, %v512, %v513
        %v515 = vsel %vm499, %v512, %v514
        %v516 = vsel %vm501, %v512, %v515
        %v520 = vadd.f32 %v296, %v502
        %v521 = vadd.f32 %v297, %v509
        %v522 = vadd.f32 %v298, %v516
        %523 = vst [vmem:[#allocation2] sm:$0xff] %v520
        %524 = vst [vmem:[#allocation2 + $0x8] sm:$0xff] %v521
        %525 = vst [vmem:[#allocation2 + $0x10] sm:$0xf] %v522
        %p526 = scmp.eq.s32.totalorder %s26, 7
        // Predicated region
        $region57: #{tpu_custom_call.1} parent=39 // pred_check
          %p527 = pneg %p526
        $region58: #{tpu_custom_call.1} parent=39 // pred_check_branch
          %529 = sbr.rel (%p527) target = $region60
        $region59: #{tpu_custom_call.1} parent=39 // pred_region
          %v530 = vld [vmem:[#allocation2] sm:$0xff]
          %v531 = vld [vmem:[#allocation2 + $0x8] sm:$0xff]
          %v532 = vld [vmem:[#allocation2 + $0x10] sm:$0xf]
          %v533 = vmul.f32 %v530, 0.015625
          %v534 = vmul.f32 %v531, 0.015625
          %v535 = vmul.f32 %v532, 0.015625
          %v536 = vld [vmem:[#allocation6] sm:$0xff]
          %v537 = vld [vmem:[#allocation6 + $0x8] sm:$0xff]
          %v538 = vld [vmem:[#allocation6 + $0x10] sm:$0xff]
          %v539 = vld [vmem:[#allocation6 + $0x18] sm:$0xff]
          %v540 = vld [vmem:[#allocation6 + $0x20] sm:$0xff]
          %v541 = vld [vmem:[#allocation6 + $0x28] sm:$0xff]
          %v542 = vld [vmem:[#allocation6 + $0x30] sm:$0xff]
          %v543 = vld [vmem:[#allocation6 + $0x38] sm:$0xff]
          %v544 = vld [vmem:[#allocation6 + $0x40] sm:$0xff]
          %v545 = vld [vmem:[#allocation6 + $0x48] sm:$0xff]
          %v546 = vld [vmem:[#allocation6 + $0x50] sm:$0xff]
          %v547 = vld [vmem:[#allocation6 + $0x58] sm:$0xff]
          %v548 = vld [vmem:[#allocation6 + $0x60] sm:$0xff]
          %v549 = vld [vmem:[#allocation6 + $0x68] sm:$0xff]
          %v550 = vld [vmem:[#allocation6 + $0x70] sm:$0xff]
          %v551 = vld [vmem:[#allocation6 + $0x78] sm:$0xff]
          %v552 = vld [vmem:[#allocation6 + $0x80] sm:$0xff]
          %v553 = vld [vmem:[#allocation6 + $0x88] sm:$0xff]
          %v554 = vld [vmem:[#allocation6 + $0x90] sm:$0xff]
          %v555 = vld [vmem:[#allocation6 + $0x98] sm:$0xff]
          %v556 = vld [vmem:[#allocation6 + $0xa0] sm:$0xff]
          %v557 = vld [vmem:[#allocation6 + $0xa8] sm:$0xff]
          %v558 = vld [vmem:[#allocation6 + $0xb0] sm:$0xff]
          %v559 = vld [vmem:[#allocation6 + $0xb8] sm:$0xff]
          %v560 = vld [vmem:[#allocation6 + $0xc0] sm:$0xff]
          %v561 = vld [vmem:[#allocation6 + $0xc8] sm:$0xff]
          %v562 = vld [vmem:[#allocation6 + $0xd0] sm:$0xff]
          %v563 = vld [vmem:[#allocation6 + $0xd8] sm:$0xff]
          %v564 = vld [vmem:[#allocation6 + $0xe0] sm:$0xff]
          %v565 = vld [vmem:[#allocation6 + $0xe8] sm:$0xff]
          %v566 = vld [vmem:[#allocation6 + $0xf0] sm:$0xff]
          %v567 = vld [vmem:[#allocation6 + $0xf8] sm:$0xff]
          %v568 = vld [vmem:[#allocation6 + $0x100] sm:$0xff]
          %v569 = vld [vmem:[#allocation6 + $0x108] sm:$0xff]
          %v570 = vld [vmem:[#allocation6 + $0x110] sm:$0xff]
          %v571 = vld [vmem:[#allocation6 + $0x118] sm:$0xff]
          %v572 = vld [vmem:[#allocation6 + $0x120] sm:$0xff]
          %v573 = vld [vmem:[#allocation6 + $0x128] sm:$0xff]
          %v574 = vld [vmem:[#allocation6 + $0x130] sm:$0xff]
          %v575 = vld [vmem:[#allocation6 + $0x138] sm:$0xff]
          %v576 = vld [vmem:[#allocation6 + $0x140] sm:$0xff]
          %v577 = vld [vmem:[#allocation6 + $0x148] sm:$0xff]
          %v578 = vld [vmem:[#allocation6 + $0x150] sm:$0xff]
          %v579 = vld [vmem:[#allocation6 + $0x158] sm:$0xff]
          %v580 = vld [vmem:[#allocation6 + $0x160] sm:$0xff]
          %v581 = vld [vmem:[#allocation6 + $0x168] sm:$0xff]
          %v582 = vld [vmem:[#allocation6 + $0x170] sm:$0xff]
          %v583 = vld [vmem:[#allocation6 + $0x178] sm:$0xff]
          %v584 = vld [vmem:[#allocation6 + $0x180] sm:$0xff]
          %v585 = vld [vmem:[#allocation6 + $0x188] sm:$0xff]
          %v586 = vld [vmem:[#allocation6 + $0x190] sm:$0xff]
          %v587 = vld [vmem:[#allocation6 + $0x198] sm:$0xff]
          %v588 = vld [vmem:[#allocation6 + $0x1a0] sm:$0xff]
          %v589 = vld [vmem:[#allocation6 + $0x1a8] sm:$0xff]
          %v590 = vld [vmem:[#allocation6 + $0x1b0] sm:$0xff]
          %v591 = vld [vmem:[#allocation6 + $0x1b8] sm:$0xff]
          %v592 = vld [vmem:[#allocation6 + $0x1c0] sm:$0xff]
          %v593 = vld [vmem:[#allocation6 + $0x1c8] sm:$0xff]
          %v594 = vld [vmem:[#allocation6 + $0x1d0] sm:$0xff]
          %v595 = vld [vmem:[#allocation6 + $0x1d8] sm:$0xff]
          %v596 = vld [vmem:[#allocation6 + $0x1e0] sm:$0xff]
          %v597 = vld [vmem:[#allocation6 + $0x1e8] sm:$0xff]
          %v598 = vld [vmem:[#allocation6 + $0x1f0] sm:$0xff]
          %v599 = vld [vmem:[#allocation6 + $0x1f8] sm:$0xff]
          %v600 = vld [vmem:[#allocation6 + $0x200] sm:$0xff]
          %v601 = vld [vmem:[#allocation6 + $0x208] sm:$0xff]
          %v602 = vld [vmem:[#allocation6 + $0x210] sm:$0xff]
          %v603 = vld [vmem:[#allocation6 + $0x218] sm:$0xff]
          %v604 = vld [vmem:[#allocation6 + $0x220] sm:$0xff]
          %v605 = vld [vmem:[#allocation6 + $0x228] sm:$0xff]
          %v606 = vld [vmem:[#allocation6 + $0x230] sm:$0xff]
          %v607 = vld [vmem:[#allocation6 + $0x238] sm:$0xff]
          %v608 = vld [vmem:[#allocation6 + $0x240] sm:$0xff]
          %v609 = vld [vmem:[#allocation6 + $0x248] sm:$0xff]
          %v610 = vld [vmem:[#allocation6 + $0x250] sm:$0xff]
          %v611 = vld [vmem:[#allocation6 + $0x258] sm:$0xff]
          %v612 = vld [vmem:[#allocation6 + $0x260] sm:$0xff]
          %v613 = vld [vmem:[#allocation6 + $0x268] sm:$0xff]
          %v614 = vld [vmem:[#allocation6 + $0x270] sm:$0xff]
          %v615 = vld [vmem:[#allocation6 + $0x278] sm:$0xff]
          %v616 = vld [vmem:[#allocation6 + $0x280] sm:$0xff]
          %v617 = vld [vmem:[#allocation6 + $0x288] sm:$0xff]
          %v618 = vld [vmem:[#allocation6 + $0x290] sm:$0xff]
          %v619 = vld [vmem:[#allocation6 + $0x298] sm:$0xff]
          %v620 = vld [vmem:[#allocation6 + $0x2a0] sm:$0xff]
          %v621 = vld [vmem:[#allocation6 + $0x2a8] sm:$0xff]
          %v622 = vld [vmem:[#allocation6 + $0x2b0] sm:$0xff]
          %v623 = vld [vmem:[#allocation6 + $0x2b8] sm:$0xff]
          %v624 = vld [vmem:[#allocation6 + $0x2c0] sm:$0xff]
          %v625 = vld [vmem:[#allocation6 + $0x2c8] sm:$0xff]
          %v626 = vld [vmem:[#allocation6 + $0x2d0] sm:$0xff]
          %v627 = vld [vmem:[#allocation6 + $0x2d8] sm:$0xff]
          %v628 = vld [vmem:[#allocation6 + $0x2e0] sm:$0xff]
          %v629 = vld [vmem:[#allocation6 + $0x2e8] sm:$0xff]
          %v630 = vld [vmem:[#allocation6 + $0x2f0] sm:$0xff]
          %v631 = vld [vmem:[#allocation6 + $0x2f8] sm:$0xff]
          %v632 = vld [vmem:[#allocation6 + $0x300] sm:$0xff]
          %v633 = vld [vmem:[#allocation6 + $0x308] sm:$0xff]
          %v634 = vld [vmem:[#allocation6 + $0x310] sm:$0xff]
          %v635 = vld [vmem:[#allocation6 + $0x318] sm:$0xff]
          %v636 = vld [vmem:[#allocation6 + $0x320] sm:$0xff]
          %v637 = vld [vmem:[#allocation6 + $0x328] sm:$0xff]
          %v638 = vld [vmem:[#allocation6 + $0x330] sm:$0xff]
          %v639 = vld [vmem:[#allocation6 + $0x338] sm:$0xff]
          %v640 = vld [vmem:[#allocation6 + $0x340] sm:$0xff]
          %v641 = vld [vmem:[#allocation6 + $0x348] sm:$0xff]
          %v642 = vld [vmem:[#allocation6 + $0x350] sm:$0xff]
          %v643 = vld [vmem:[#allocation6 + $0x358] sm:$0xff]
          %v644 = vld [vmem:[#allocation6 + $0x360] sm:$0xff]
          %v645 = vld [vmem:[#allocation6 + $0x368] sm:$0xff]
          %v646 = vld [vmem:[#allocation6 + $0x370] sm:$0xff]
          %v647 = vld [vmem:[#allocation6 + $0x378] sm:$0xff]
          %v648 = vld [vmem:[#allocation6 + $0x380] sm:$0xff]
          %v649 = vld [vmem:[#allocation6 + $0x388] sm:$0xff]
          %v650 = vld [vmem:[#allocation6 + $0x390] sm:$0xff]
          %v651 = vld [vmem:[#allocation6 + $0x398] sm:$0xff]
          %v652 = vld [vmem:[#allocation6 + $0x3a0] sm:$0xff]
          %v653 = vld [vmem:[#allocation6 + $0x3a8] sm:$0xff]
          %v654 = vld [vmem:[#allocation6 + $0x3b0] sm:$0xff]
          %v655 = vld [vmem:[#allocation6 + $0x3b8] sm:$0xff]
          %v656 = vld [vmem:[#allocation6 + $0x3c0] sm:$0xff]
          %v657 = vld [vmem:[#allocation6 + $0x3c8] sm:$0xff]
          %v658 = vld [vmem:[#allocation6 + $0x3d0] sm:$0xff]
          %v659 = vld [vmem:[#allocation6 + $0x3d8] sm:$0xff]
          %v660 = vld [vmem:[#allocation6 + $0x3e0] sm:$0xff]
          %v661 = vld [vmem:[#allocation6 + $0x3e8] sm:$0xff]
          %v662 = vld [vmem:[#allocation6 + $0x3f0] sm:$0xff]
          %v663 = vld [vmem:[#allocation6 + $0x3f8] sm:$0xff]
          %v664 = vld [vmem:[#allocation6 + $0x400] sm:$0xff]
          %v665 = vld [vmem:[#allocation6 + $0x408] sm:$0xff]
          %v666 = vld [vmem:[#allocation6 + $0x410] sm:$0xff]
          %v667 = vld [vmem:[#allocation6 + $0x418] sm:$0xff]
          %v668 = vld [vmem:[#allocation6 + $0x420] sm:$0xff]
          %v669 = vld [vmem:[#allocation6 + $0x428] sm:$0xff]
          %v670 = vld [vmem:[#allocation6 + $0x430] sm:$0xff]
          %v671 = vld [vmem:[#allocation6 + $0x438] sm:$0xff]
          %v672 = vld [vmem:[#allocation6 + $0x440] sm:$0xff]
          %v673 = vld [vmem:[#allocation6 + $0x448] sm:$0xff]
          %v674 = vld [vmem:[#allocation6 + $0x450] sm:$0xff]
          %v675 = vld [vmem:[#allocation6 + $0x458] sm:$0xff]
          %v676 = vld [vmem:[#allocation6 + $0x460] sm:$0xff]
          %v677 = vld [vmem:[#allocation6 + $0x468] sm:$0xff]
          %v678 = vld [vmem:[#allocation6 + $0x470] sm:$0xff]
          %v679 = vld [vmem:[#allocation6 + $0x478] sm:$0xff]
          %v680 = vld [vmem:[#allocation6 + $0x480] sm:$0xff]
          %v681 = vld [vmem:[#allocation6 + $0x488] sm:$0xff]
          %v682 = vld [vmem:[#allocation6 + $0x490] sm:$0xff]
          %v683 = vld [vmem:[#allocation6 + $0x498] sm:$0xff]
          %v684 = vld [vmem:[#allocation6 + $0x4a0] sm:$0xff]
          %v685 = vld [vmem:[#allocation6 + $0x4a8] sm:$0xff]
          %v686 = vld [vmem:[#allocation6 + $0x4b0] sm:$0xff]
          %v687 = vld [vmem:[#allocation6 + $0x4b8] sm:$0xff]
          %v688 = vld [vmem:[#allocation6 + $0x4c0] sm:$0xff]
          %v689 = vld [vmem:[#allocation6 + $0x4c8] sm:$0xff]
          %v690 = vld [vmem:[#allocation6 + $0x4d0] sm:$0xff]
          %v691 = vld [vmem:[#allocation6 + $0x4d8] sm:$0xff]
          %v692 = vld [vmem:[#allocation6 + $0x4e0] sm:$0xff]
          %v693 = vld [vmem:[#allocation6 + $0x4e8] sm:$0xff]
          %v694 = vld [vmem:[#allocation6 + $0x4f0] sm:$0xff]
          %v695 = vld [vmem:[#allocation6 + $0x4f8] sm:$0xff]
          %v696 = vld [vmem:[%s2] sm:$0x1]
          %v698 = vperm.slane %v696, 0
          %703 = vst [vmem:[#allocation1] ss:$4 sm:$0xff] %v533
          %s704 = scalar_lea.vmem [#allocation1], 32
          %705 = vst [vmem:[%s704] ss:$4 sm:$0xff] %v534
          %v706 = vld.sshfl [vmem:[#allocation1] sm:$0xff pattern:$0x73625140]
          %v707 = vld.sshfl [vmem:[#allocation1 + $0x8] sm:$0xff pattern:$0x73625140]
          %v708 = vld.sshfl [vmem:[#allocation1 + $0x10] sm:$0xff pattern:$0x73625140]
          %v709 = vld.sshfl [vmem:[#allocation1 + $0x18] sm:$0xff pattern:$0x73625140]
          %v710 = vld.sshfl [vmem:[#allocation1 + $0x20] sm:$0xff pattern:$0x73625140]
          %v711 = vld.sshfl [vmem:[#allocation1 + $0x28] sm:$0xff pattern:$0x73625140]
          %v712 = vld.sshfl [vmem:[#allocation1 + $0x30] sm:$0xff pattern:$0x73625140]
          %v713 = vld.sshfl [vmem:[#allocation1 + $0x38] sm:$0xff pattern:$0x73625140]
          %714 = vst [vmem:[#allocation1] ss:$4 sm:$0xff] %v535
          %v715 = vld.sshfl [vmem:[#allocation1] sm:$0xff pattern:$0x73625140]
          %v716 = vld.sshfl [vmem:[#allocation1 + $0x8] sm:$0xff pattern:$0x73625140]
          %727 = vmatpush.msra.mxu0 %v551
          %728 = vmatpush.msra.mxu0 %v550
          %729 = vmatpush.msra.mxu0 %v549
          %730 = vmatpush.msra.mxu0 %v548
          %731 = vmatpush.msra.mxu0 %v547
          %732 = vmatpush.msra.mxu0 %v546
          %733 = vmatpush.msra.mxu0 %v545
          %734 = vmatpush.msra.mxu0 %v544
          %735 = vmatpush.msra.mxu0 %v543
          %736 = vmatpush.msra.mxu0 %v542
          %737 = vmatpush.msra.mxu0 %v541
          %738 = vmatpush.msra.mxu0 %v540
          %739 = vmatpush.msra.mxu0 %v539
          %740 = vmatpush.msra.mxu0 %v538
          %741 = vmatpush.msra.mxu0 %v537
          %742 = vmatpush.msra.mxu0 %v536
          %743 = vmatmul.f32.gmra.mxu0 %v706
          %v744 = vpop.f32.mrf.mxu0
          %v745 = vadd.f32 %v698, %v744
          %746 = vdwg.mxu0
          %747 = vmatpush.msra.mxu0 %v567
          %748 = vmatpush.msra.mxu0 %v566
          %749 = vmatpush.msra.mxu0 %v565
          %750 = vmatpush.msra.mxu0 %v564
          %751 = vmatpush.msra.mxu0 %v563
          %752 = vmatpush.msra.mxu0 %v562
          %753 = vmatpush.msra.mxu0 %v561
          %754 = vmatpush.msra.mxu0 %v560
          %755 = vmatpush.msra.mxu0 %v559
          %756 = vmatpush.msra.mxu0 %v558
          %757 = vmatpush.msra.mxu0 %v557
          %758 = vmatpush.msra.mxu0 %v556
          %759 = vmatpush.msra.mxu0 %v555
          %760 = vmatpush.msra.mxu0 %v554
          %761 = vmatpush.msra.mxu0 %v553
          %762 = vmatpush.msra.mxu0 %v552
          %763 = vmatmul.f32.gmra.mxu0 %v707
          %v764 = vpop.f32.mrf.mxu0
          %v765 = vadd.f32 %v745, %v764
          %766 = vdwg.mxu0
          %767 = vmatpush.msra.mxu0 %v583
          %768 = vmatpush.msra.mxu0 %v582
          %769 = vmatpush.msra.mxu0 %v581
          %770 = vmatpush.msra.mxu0 %v580
          %771 = vmatpush.msra.mxu0 %v579
          %772 = vmatpush.msra.mxu0 %v578
          %773 = vmatpush.msra.mxu0 %v577
          %774 = vmatpush.msra.mxu0 %v576
          %775 = vmatpush.msra.mxu0 %v575
          %776 = vmatpush.msra.mxu0 %v574
          %777 = vmatpush.msra.mxu0 %v573
          %778 = vmatpush.msra.mxu0 %v572
          %779 = vmatpush.msra.mxu0 %v571
          %780 = vmatpush.msra.mxu0 %v570
          %781 = vmatpush.msra.mxu0 %v569
          %782 = vmatpush.msra.mxu0 %v568
          %783 = vmatmul.f32.gmra.mxu0 %v708
          %v784 = vpop.f32.mrf.mxu0
          %v785 = vadd.f32 %v765, %v784
          %786 = vdwg.mxu0
          %787 = vmatpush.msra.mxu0 %v599
          %788 = vmatpush.msra.mxu0 %v598
          %789 = vmatpush.msra.mxu0 %v597
          %790 = vmatpush.msra.mxu0 %v596
          %791 = vmatpush.msra.mxu0 %v595
          %792 = vmatpush.msra.mxu0 %v594
          %793 = vmatpush.msra.mxu0 %v593
          %794 = vmatpush.msra.mxu0 %v592
          %795 = vmatpush.msra.mxu0 %v591
          %796 = vmatpush.msra.mxu0 %v590
          %797 = vmatpush.msra.mxu0 %v589
          %798 = vmatpush.msra.mxu0 %v588
          %799 = vmatpush.msra.mxu0 %v587
          %800 = vmatpush.msra.mxu0 %v586
          %801 = vmatpush.msra.mxu0 %v585
          %802 = vmatpush.msra.mxu0 %v584
          %803 = vmatmul.f32.gmra.mxu0 %v709
          %v804 = vpop.f32.mrf.mxu0
          %v805 = vadd.f32 %v785, %v804
          %806 = vdwg.mxu0
          %807 = vmatpush.msra.mxu0 %v615
          %808 = vmatpush.msra.mxu0 %v614
          %809 = vmatpush.msra.mxu0 %v613
          %810 = vmatpush.msra.mxu0 %v612
          %811 = vmatpush.msra.mxu0 %v611
          %812 = vmatpush.msra.mxu0 %v610
          %813 = vmatpush.msra.mxu0 %v609
          %814 = vmatpush.msra.mxu0 %v608
          %815 = vmatpush.msra.mxu0 %v607
          %816 = vmatpush.msra.mxu0 %v606
          %817 = vmatpush.msra.mxu0 %v605
          %818 = vmatpush.msra.mxu0 %v604
          %819 = vmatpush.msra.mxu0 %v603
          %820 = vmatpush.msra.mxu0 %v602
          %821 = vmatpush.msra.mxu0 %v601
          %822 = vmatpush.msra.mxu0 %v600
          %823 = vmatmul.f32.gmra.mxu0 %v710
          %v824 = vpop.f32.mrf.mxu0
          %v825 = vadd.f32 %v805, %v824
          %826 = vdwg.mxu0
          %827 = vmatpush.msra.mxu0 %v631
          %828 = vmatpush.msra.mxu0 %v630
          %829 = vmatpush.msra.mxu0 %v629
          %830 = vmatpush.msra.mxu0 %v628
          %831 = vmatpush.msra.mxu0 %v627
          %832 = vmatpush.msra.mxu0 %v626
          %833 = vmatpush.msra.mxu0 %v625
          %834 = vmatpush.msra.mxu0 %v624
          %835 = vmatpush.msra.mxu0 %v623
          %836 = vmatpush.msra.mxu0 %v622
          %837 = vmatpush.msra.mxu0 %v621
          %838 = vmatpush.msra.mxu0 %v620
          %839 = vmatpush.msra.mxu0 %v619
          %840 = vmatpush.msra.mxu0 %v618
          %841 = vmatpush.msra.mxu0 %v617
          %842 = vmatpush.msra.mxu0 %v616
          %843 = vmatmul.f32.gmra.mxu0 %v711
          %v844 = vpop.f32.mrf.mxu0
          %v845 = vadd.f32 %v825, %v844
          %846 = vdwg.mxu0
          %847 = vmatpush.msra.mxu0 %v647
          %848 = vmatpush.msra.mxu0 %v646
          %849 = vmatpush.msra.mxu0 %v645
          %850 = vmatpush.msra.mxu0 %v644
          %851 = vmatpush.msra.mxu0 %v643
          %852 = vmatpush.msra.mxu0 %v642
          %853 = vmatpush.msra.mxu0 %v641
          %854 = vmatpush.msra.mxu0 %v640
          %855 = vmatpush.msra.mxu0 %v639
          %856 = vmatpush.msra.mxu0 %v638
          %857 = vmatpush.msra.mxu0 %v637
          %858 = vmatpush.msra.mxu0 %v636
          %859 = vmatpush.msra.mxu0 %v635
          %860 = vmatpush.msra.mxu0 %v634
          %861 = vmatpush.msra.mxu0 %v633
          %862 = vmatpush.msra.mxu0 %v632
          %863 = vmatmul.f32.gmra.mxu0 %v712
          %v864 = vpop.f32.mrf.mxu0
          %v865 = vadd.f32 %v845, %v864
          %866 = vdwg.mxu0
          %867 = vmatpush.msra.mxu0 %v663
          %868 = vmatpush.msra.mxu0 %v662
          %869 = vmatpush.msra.mxu0 %v661
          %870 = vmatpush.msra.mxu0 %v660
          %871 = vmatpush.msra.mxu0 %v659
          %872 = vmatpush.msra.mxu0 %v658
          %873 = vmatpush.msra.mxu0 %v657
          %874 = vmatpush.msra.mxu0 %v656
          %875 = vmatpush.msra.mxu0 %v655
          %876 = vmatpush.msra.mxu0 %v654
          %877 = vmatpush.msra.mxu0 %v653
          %878 = vmatpush.msra.mxu0 %v652
          %879 = vmatpush.msra.mxu0 %v651
          %880 = vmatpush.msra.mxu0 %v650
          %881 = vmatpush.msra.mxu0 %v649
          %882 = vmatpush.msra.mxu0 %v648
          %883 = vmatmul.f32.gmra.mxu0 %v713
          %v884 = vpop.f32.mrf.mxu0
          %v885 = vadd.f32 %v865, %v884
          %886 = vdwg.mxu0
          %887 = vmatpush.msra.mxu0 %v679
          %888 = vmatpush.msra.mxu0 %v678
          %889 = vmatpush.msra.mxu0 %v677
          %890 = vmatpush.msra.mxu0 %v676
          %891 = vmatpush.msra.mxu0 %v675
          %892 = vmatpush.msra.mxu0 %v674
          %893 = vmatpush.msra.mxu0 %v673
          %894 = vmatpush.msra.mxu0 %v672
          %895 = vmatpush.msra.mxu0 %v671
          %896 = vmatpush.msra.mxu0 %v670
          %897 = vmatpush.msra.mxu0 %v669
          %898 = vmatpush.msra.mxu0 %v668
          %899 = vmatpush.msra.mxu0 %v667
          %900 = vmatpush.msra.mxu0 %v666
          %901 = vmatpush.msra.mxu0 %v665
          %902 = vmatpush.msra.mxu0 %v664
          %903 = vmatmul.f32.gmra.mxu0 %v715
          %v904 = vpop.f32.mrf.mxu0
          %v905 = vadd.f32 %v885, %v904
          %906 = vdwg.mxu0
          %907 = vmatpush.msra.mxu0 %v695
          %908 = vmatpush.msra.mxu0 %v694
          %909 = vmatpush.msra.mxu0 %v693
          %910 = vmatpush.msra.mxu0 %v692
          %911 = vmatpush.msra.mxu0 %v691
          %912 = vmatpush.msra.mxu0 %v690
          %913 = vmatpush.msra.mxu0 %v689
          %914 = vmatpush.msra.mxu0 %v688
          %915 = vmatpush.msra.mxu0 %v687
          %916 = vmatpush.msra.mxu0 %v686
          %917 = vmatpush.msra.mxu0 %v685
          %918 = vmatpush.msra.mxu0 %v684
          %919 = vmatpush.msra.mxu0 %v683
          %920 = vmatpush.msra.mxu0 %v682
          %921 = vmatpush.msra.mxu0 %v681
          %922 = vmatpush.msra.mxu0 %v680
          %923 = vmatmul.f32.gmra.mxu0 %v716
          %v924 = vpop.f32.mrf.mxu0
          %v925 = vadd.f32 %v905, %v924
          %926 = vdwg.mxu0
          %v927 = vmax.f32 %v925, 0.0
          %v928 = vld [vmem:[#allocation8] sm:$0xff]
          %v929 = vld [vmem:[#allocation8 + $0x8] sm:$0xff]
          %v930 = vld [vmem:[#allocation8 + $0x10] sm:$0xff]
          %v931 = vld [vmem:[#allocation8 + $0x18] sm:$0xff]
          %v932 = vld [vmem:[#allocation8 + $0x20] sm:$0xff]
          %v933 = vld [vmem:[#allocation8 + $0x28] sm:$0xff]
          %v934 = vld [vmem:[#allocation8 + $0x30] sm:$0xff]
          %v935 = vld [vmem:[#allocation8 + $0x38] sm:$0xff]
          %v936 = vld [vmem:[#allocation8 + $0x40] sm:$0xff]
          %v937 = vld [vmem:[#allocation8 + $0x48] sm:$0xff]
          %v938 = vld [vmem:[#allocation8 + $0x50] sm:$0xff]
          %v939 = vld [vmem:[#allocation8 + $0x58] sm:$0xff]
          %v940 = vld [vmem:[#allocation8 + $0x60] sm:$0xff]
          %v941 = vld [vmem:[#allocation8 + $0x68] sm:$0xff]
          %v942 = vld [vmem:[#allocation8 + $0x70] sm:$0xff]
          %v943 = vld [vmem:[#allocation8 + $0x78] sm:$0xff]
          %v944 = vld [vmem:[%s4] sm:$0x1]
          %v946 = vperm.slane %v944, 0
          %948 = vmatpush.msra.mxu0 %v943
          %949 = vmatpush.msra.mxu0 %v942
          %950 = vmatpush.msra.mxu0 %v941
          %951 = vmatpush.msra.mxu0 %v940
          %952 = vmatpush.msra.mxu0 %v939
          %953 = vmatpush.msra.mxu0 %v938
          %954 = vmatpush.msra.mxu0 %v937
          %955 = vmatpush.msra.mxu0 %v936
          %956 = vmatpush.msra.mxu0 %v935
          %957 = vmatpush.msra.mxu0 %v934
          %958 = vmatpush.msra.mxu0 %v933
          %959 = vmatpush.msra.mxu0 %v932
          %960 = vmatpush.msra.mxu0 %v931
          %961 = vmatpush.msra.mxu0 %v930
          %962 = vmatpush.msra.mxu0 %v929
          %963 = vmatpush.msra.mxu0 %v928
          %964 = vmatmul.f32.gmra.mxu0 %v927
          %v965 = vpop.f32.mrf.mxu0
          %v966 = vadd.f32 %v946, %v965
          %967 = vdwg.mxu0
          %968 = vst [vmem:[#allocation9] sm:$0x3] %v966
        $region60: #{tpu_custom_call.1} parent=39 // pred_fallthru
          _
        // Predicated region
        $region61: #{tpu_custom_call.1} parent=39 // pred_check
          %p969 = pneg %p163
        $region62: #{tpu_custom_call.1} parent=39 // pred_check_branch
          %971 = sbr.rel (%p969) target = $region64
        $region63: #{tpu_custom_call.1} parent=39 // pred_region
          %973 = vsyncadd [#allocation5], 0
          %s974 = smul.addr %s25, 2
          %s975 = scalar_lea.hbm %s5, %s974
          %s977 = sshll.u32 [#allocation9], 4
          %s978 = int_to_ptr.vmem [resolvable:$true] %s977
          %s979 = sshll.u32 %s975, 4
          %s980 = int_to_ptr.hbm [resolvable:$true] %s979
          %982 = dma.vmem_to_hbm [thread:$0]  %s978, 32, %s980, [#allocation5]
        $region64: #{tpu_custom_call.1} parent=39 // pred_fallthru
          _
        // Predicated region
        $region65: #{tpu_custom_call.1} parent=39 // pred_check
          %p983 = pneg %p163
        $region66: #{tpu_custom_call.1} parent=39 // pred_check_branch
          %985 = sbr.rel (%p983) target = $region68
        $region67: #{tpu_custom_call.1} parent=39 // pred_region
          %987 = dma.done [#allocation5], 32
        $region68: #{tpu_custom_call.1} parent=39 // pred_fallthru
          _
      $region40: #{tpu_custom_call.1} parent=5 // pred_fallthru
        _
      %p988 = scmp.le.s32.totalorder 2, %s16
      // Predicated region
      $region69: #{tpu_custom_call.1} parent=5 // pred_check
        %p989 = pneg %p988
      $region70: #{tpu_custom_call.1} parent=5 // pred_check_branch
        %991 = sbr.rel (%p989) target = $region72
      $region71: #{tpu_custom_call.1} parent=5 // pred_region
        %s992 = ssub.s32 %s16, 2
      $region72: #{tpu_custom_call.1} parent=5 // pred_fallthru
        _
    $region6: #{tpu_custom_call.1} parent=1 // loop_footer
      %s20 = sadd.s32 1, %s16
    $region7: #{tpu_custom_call.1} parent=1 // loop_footer_branch
      %15 = sbr.rel target = $region3
    $region8: #{tpu_custom_call.1} parent=1 // loop_exit
      _
    %993 = vsyncpa [#allocation4], 1
    %s994 = scalar_lea.sflag [#allocation4], 1
    %995 = vsyncpa %s994, 1
    %996 = vsyncpa [#allocation7], 1
    %997 = vsyncpa [#allocation5], 1
    %s998 = scalar_lea.sflag [#allocation5], 1
    %999 = vsyncpa %s998, 1

</llo_original>
